<compile_context>
chip_gen: v7x
topology: tpu7x:2x2x1
jax: 0.10.0
libtpu: 0.0.40
codegen_flags: <defaults>
</compile_context>

<pallas_src>
import random

import numpy as np
import jax
import jax.numpy as jnp
from jax.experimental import pallas as pl
from jax.experimental.pallas import tpu as pltpu


# ----------------------------------------------------------------------------
# JPEG constants
# ----------------------------------------------------------------------------
_LUMA_QT = np.array(
    [[16, 11, 10, 16, 24, 40, 51, 61],
     [12, 12, 14, 19, 26, 58, 60, 55],
     [14, 13, 16, 24, 40, 57, 69, 56],
     [14, 17, 22, 29, 51, 87, 80, 62],
     [18, 22, 37, 56, 68, 109, 103, 77],
     [24, 35, 55, 64, 81, 104, 113, 92],
     [49, 64, 78, 87, 103, 121, 120, 101],
     [72, 92, 95, 98, 112, 100, 103, 99]], dtype=np.float32)

_CHROMA_QT = np.array(
    [[17, 18, 24, 47, 99, 99, 99, 99],
     [18, 21, 26, 66, 99, 99, 99, 99],
     [24, 26, 56, 99, 99, 99, 99, 99],
     [47, 66, 99, 99, 99, 99, 99, 99],
     [99, 99, 99, 99, 99, 99, 99, 99],
     [99, 99, 99, 99, 99, 99, 99, 99],
     [99, 99, 99, 99, 99, 99, 99, 99],
     [99, 99, 99, 99, 99, 99, 99, 99]], dtype=np.float32)


def _dct8_matrix() -> np.ndarray:
    # Orthonormal 1-D DCT-II basis D (8x8); 2-D block DCT is D @ X @ D.T.
    n = np.arange(8)
    D = np.cos(np.pi * (2.0 * n[None, :] + 1.0) * n[:, None] / 16.0)
    alpha = np.full((8, 1), np.sqrt(2.0 / 8.0))
    alpha[0, 0] = np.sqrt(1.0 / 8.0)
    return (alpha * D).astype(np.float32)


def _dct_mats(TH: int, CW: int):
    """Block-diagonal separable DCT matrices (bf16 MXU operands).

    Vertical fwd:  kron(I_{TH/8}, D)     left-multiplied   (TH, TH)
    Horizontal fwd: kron(I_{CW/8}, D).T  right-multiplied  (CW, CW)
    Inverses are the transposes (D is orthonormal).
    """
    D = _dct8_matrix()
    kv = np.kron(np.eye(TH // 8, dtype=np.float32), D)      # (TH, TH)
    kh = np.kron(np.eye(CW // 8, dtype=np.float32), D).T    # (CW, CW)
    return (jnp.asarray(kv, jnp.bfloat16), jnp.asarray(kv.T, jnp.bfloat16),
            jnp.asarray(kh, jnp.bfloat16), jnp.asarray(kh.T, jnp.bfloat16))


def _quant_maps(quality, TH: int, CW: int):
    """Quality-scaled quant tables as (3, TH, CW) maps (traced; tiny XLA ops)."""
    q = jnp.clip(jnp.asarray(quality, jnp.float32), 1.0, 100.0)
    scale = jnp.where(q < 50.0, 5000.0 / q, 200.0 - 2.0 * q)

    def scaled(base):
        t = jnp.floor((jnp.asarray(base, jnp.float32) * scale + 50.0) / 100.0)
        return jnp.clip(t, 1.0, 255.0)

    luma = scaled(_LUMA_QT)
    chroma = scaled(_CHROMA_QT)
    q3 = jnp.stack([luma, chroma, chroma])                   # (3, 8, 8)
    qmap = jnp.tile(q3, (1, TH // 8, CW // 8))               # (3, TH, CW)
    return (1.0 / qmap).astype(jnp.float32), qmap.astype(jnp.float32)


# ----------------------------------------------------------------------------
# Pallas kernel: fused color transform + separable DCT + diff-quant + IDCT
# ----------------------------------------------------------------------------
def _diff_jpeg_kernel(x_ref, kvf_ref, kvi_ref, khf_ref, khi_ref,
                      qinv_ref, q_ref, out_ref):
    # x_ref / out_ref: (1, 3, TH, CW) f32 RGB in [0, 1] (natural NCHW layout).
    r = x_ref[0, 0]
    g = x_ref[0, 1]
    b = x_ref[0, 2]

    # RGB -> YCbCr with the x255 folded into the coefficients and the JPEG
    # level shift (-128) folded into Y (Cb/Cr's +128 cancels the level shift).
    y  =  76.245   * r + 149.685   * g +  29.07    * b - 128.0
    cb = -43.02768 * r -  84.47232 * g + 127.5     * b
    cr = 127.5     * r - 106.76544 * g -  20.73456 * b

    kvf = kvf_ref[...]
    kvi = kvi_ref[...]
    khf = khf_ref[...]
    khi = khi_ref[...]

    rec = []
    for c, chan in enumerate((y, cb, cr)):
        # separable 8x8 block DCT: vertical (rows) then horizontal (lanes),
        # bf16 MXU operands with f32 accumulation.
        t = jnp.dot(kvf, chan.astype(jnp.bfloat16),
                    preferred_element_type=jnp.float32)
        t = jnp.dot(t.astype(jnp.bfloat16), khf,
                    preferred_element_type=jnp.float32)
        # Shin & Song differentiable rounding: round(s) + (s - round(s))^3.
        s = t * qinv_ref[c]
        rr = jnp.round(s)
        d = s - rr
        coef = (rr + d * d * d) * q_ref[c]
        # dequantized coefficients -> inverse DCT.
        t = jnp.dot(coef.astype(jnp.bfloat16), khi,
                    preferred_element_type=jnp.float32)
        rec.append(jnp.dot(kvi, t.astype(jnp.bfloat16),
                           preferred_element_type=jnp.float32))

    yr, cbr, crr = rec
    # YCbCr -> RGB with the /255 folded into the coefficients; clip to [0, 1].
    inv = 1.0 / 255.0
    bias = 128.0 / 255.0
    r_o = inv * yr + (1.402 * inv) * crr + bias
    g_o = inv * yr - (0.344136 * inv) * cbr - (0.714136 * inv) * crr + bias
    b_o = inv * yr + (1.772 * inv) * cbr + bias
    out_ref[0, 0] = jnp.clip(r_o, 0.0, 1.0)
    out_ref[0, 1] = jnp.clip(g_o, 0.0, 1.0)
    out_ref[0, 2] = jnp.clip(b_o, 0.0, 1.0)


def _diff_jpeg_call(x, kvf, kvi, khf, khi, qinv, qmap, TH: int, CW: int):
    B, C, H, W = x.shape
    grid = (B, H // TH, W // CW)
    return pl.pallas_call(
        _diff_jpeg_kernel,
        out_shape=jax.ShapeDtypeStruct((B, C, H, W), jnp.float32),
        grid_spec=pltpu.PrefetchScalarGridSpec(
            num_scalar_prefetch=0,
            grid=grid,
            in_specs=[
                pl.BlockSpec((1, 3, TH, CW), lambda b, i, j: (b, 0, i, j)),
                pl.BlockSpec((TH, TH), lambda b, i, j: (0, 0)),      # resident
                pl.BlockSpec((TH, TH), lambda b, i, j: (0, 0)),      # resident
                pl.BlockSpec((CW, CW), lambda b, i, j: (0, 0)),      # resident
                pl.BlockSpec((CW, CW), lambda b, i, j: (0, 0)),      # resident
                pl.BlockSpec((3, TH, CW), lambda b, i, j: (0, 0, 0)),
                pl.BlockSpec((3, TH, CW), lambda b, i, j: (0, 0, 0)),
            ],
            out_specs=pl.BlockSpec((1, 3, TH, CW), lambda b, i, j: (b, 0, i, j)),
        ),
        compiler_params=pltpu.CompilerParams(
            dimension_semantics=("parallel", "parallel", "parallel"),
            vmem_limit_bytes=32 * 1024 * 1024),
    )(x, kvf, kvi, khf, khi, qinv, qmap)


# ----------------------------------------------------------------------------
# Tile selection (exact divisors -> no padding, no wasted HBM traffic)
# ----------------------------------------------------------------------------
def _pick_tile(n: int, max_tile: int) -> int:
    """Largest multiple of 8 that divides n and is <= max_tile (n % 8 == 0)."""
    best = 8
    d = 8
    lim = min(n, max_tile)
    while d <= lim:
        if n % d == 0:
            best = d
        d += 8
    return best


# ----------------------------------------------------------------------------
# Noiser forward (diff_jpeg is the only registered layer in the default config)
# ----------------------------------------------------------------------------
def noiser_forward(x, quality, *, max_row_tile: int = 256):
    """x: (B, 3, H, W) float32 in [0, 1]; quality: scalar (may be traced)."""
    B, C, H, W = x.shape
    assert C == 3 and H % 8 == 0 and W % 8 == 0
    x = x.astype(jnp.float32)

    # Row tile (sublane dim) and lane tile: exact divisors, capped at 256 so
    # the block-diagonal DCT matmuls stay cheap on v5e's 128-wide MXU while
    # keeping per-step work large enough to amortize grid-step overhead.
    TH = _pick_tile(H, max_row_tile)
    if W <= 256 or W % 128 != 0:
        CW = W
    else:
        CW = 256 if W % 256 == 0 else 128

    # v7x has 2 TensorCores: keep >= 4 grid steps when the input allows it.
    while B * (H // TH) * (W // CW) < 4 and TH > 8:
        TH = _pick_tile(H, TH - 8)

    kvf, kvi, khf, khi = _dct_mats(TH, CW)
    qinv, qmap = _quant_maps(quality, TH, CW)
    return _diff_jpeg_call(x, kvf, kvi, khf, khi, qinv, qmap, TH, CW)


if __name__ == "__main__":
    # Noiser(layers=[('diff_jpeg', {'max_quality': 90, 'min_quality': 50})]):
    # forward(x) = random.choice(self.models)(x); the only registered model is
    # diff_jpeg, whose quality is sampled uniformly in [50, 90].
    random.seed(0)
    models = ["diff_jpeg"]
    _ = random.choice(models)                  # mirrors random.choice(self.models)
    quality = random.randint(50, 90)

    B, C, H, W = 2, 3, 16, 16
    key = jax.random.PRNGKey(0)
    x = jax.random.uniform(key, (B, C, H, W), dtype=jnp.float32)

    # quality is passed as a traced scalar: under jit the quant tables are
    # rebuilt from it per call, so a new random quality never forces a retrace.
    y = noiser_forward(x, jnp.asarray(quality, dtype=jnp.float32))
    y = jax.block_until_ready(y)

    assert y.shape == (B, C, H, W)
    assert bool(jnp.all(jnp.isfinite(y)))
    assert bool(jnp.all((y >= 0.0) & (y <= 1.0)))
    print("KERNEL_OK")
</pallas_src>

<mosaic_0001>
module attributes {stable_mosaic.version = 11 : i64} {
  func.func @_diff_jpeg_kernel(%arg0: i32, %arg1: i32, %arg2: i32, %arg3: memref<1x3x8x16xf32, #tpu.memory_space<vmem>>, %arg4: memref<8x8xbf16, #tpu.memory_space<vmem>>, %arg5: memref<8x8xbf16, #tpu.memory_space<vmem>>, %arg6: memref<16x16xbf16, #tpu.memory_space<vmem>>, %arg7: memref<16x16xbf16, #tpu.memory_space<vmem>>, %arg8: memref<3x8x16xf32, #tpu.memory_space<vmem>>, %arg9: memref<3x8x16xf32, #tpu.memory_space<vmem>>, %arg10: memref<1x3x8x16xf32, #tpu.memory_space<vmem>>) attributes {dimension_semantics = [#tpu.dimension_semantics<parallel>, #tpu.dimension_semantics<parallel>, #tpu.dimension_semantics<parallel>], iteration_bounds = array<i64: 2, 2, 1>, scalar_prefetch = 0 : i64, scratch_operands = 0 : i64, tpu.core_type = #tpu.core_type<tc>, window_params = [{transform_indices = @transform_0, window_bounds = array<i64: 1, 3, 8, 16>}, {pipeline_mode = #tpu.pipeline_mode<synchronous>, transform_indices = @transform_1, window_bounds = array<i64: 8, 8>}, {pipeline_mode = #tpu.pipeline_mode<synchronous>, transform_indices = @transform_2, window_bounds = array<i64: 8, 8>}, {pipeline_mode = #tpu.pipeline_mode<synchronous>, transform_indices = @transform_3, window_bounds = array<i64: 16, 16>}, {pipeline_mode = #tpu.pipeline_mode<synchronous>, transform_indices = @transform_4, window_bounds = array<i64: 16, 16>}, {pipeline_mode = #tpu.pipeline_mode<synchronous>, transform_indices = @transform_5, window_bounds = array<i64: 3, 8, 16>}, {pipeline_mode = #tpu.pipeline_mode<synchronous>, transform_indices = @transform_6, window_bounds = array<i64: 3, 8, 16>}, {transform_indices = @transform_7, window_bounds = array<i64: 1, 3, 8, 16>}]} {
    %c0 = arith.constant 0 : index
    %c0_0 = arith.constant 0 : index
    %c0_1 = arith.constant 0 : index
    %c0_2 = arith.constant 0 : index
    %0 = vector.load %arg3[%c0, %c0_0, %c0_1, %c0_2] : memref<1x3x8x16xf32, #tpu.memory_space<vmem>>, vector<1x1x8x16xf32>
    %1 = vector.shape_cast %0 : vector<1x1x8x16xf32> to vector<8x16xf32>
    %c0_3 = arith.constant 0 : index
    %c1 = arith.constant 1 : index
    %c0_4 = arith.constant 0 : index
    %c0_5 = arith.constant 0 : index
    %2 = vector.load %arg3[%c0_3, %c1, %c0_4, %c0_5] : memref<1x3x8x16xf32, #tpu.memory_space<vmem>>, vector<1x1x8x16xf32>
    %3 = vector.shape_cast %2 : vector<1x1x8x16xf32> to vector<8x16xf32>
    %c0_6 = arith.constant 0 : index
    %c2 = arith.constant 2 : index
    %c0_7 = arith.constant 0 : index
    %c0_8 = arith.constant 0 : index
    %4 = vector.load %arg3[%c0_6, %c2, %c0_7, %c0_8] : memref<1x3x8x16xf32, #tpu.memory_space<vmem>>, vector<1x1x8x16xf32>
    %5 = vector.shape_cast %4 : vector<1x1x8x16xf32> to vector<8x16xf32>
    %cst = arith.constant 7.624500e+01 : f32
    %6 = vector.broadcast %cst : f32 to vector<8x16xf32>
    %7 = arith.mulf %6, %1 : vector<8x16xf32>
    %cst_9 = arith.constant 1.496850e+02 : f32
    %8 = vector.broadcast %cst_9 : f32 to vector<8x16xf32>
    %9 = arith.mulf %8, %3 : vector<8x16xf32>
    %10 = arith.addf %7, %9 : vector<8x16xf32>
    %cst_10 = arith.constant 2.907000e+01 : f32
    %11 = vector.broadcast %cst_10 : f32 to vector<8x16xf32>
    %12 = arith.mulf %11, %5 : vector<8x16xf32>
    %13 = arith.addf %10, %12 : vector<8x16xf32>
    %cst_11 = arith.constant 1.280000e+02 : f32
    %14 = vector.broadcast %cst_11 : f32 to vector<8x16xf32>
    %15 = arith.subf %13, %14 : vector<8x16xf32>
    %cst_12 = arith.constant -43.0276794 : f32
    %16 = vector.broadcast %cst_12 : f32 to vector<8x16xf32>
    %17 = arith.mulf %16, %1 : vector<8x16xf32>
    %cst_13 = arith.constant 84.4723205 : f32
    %18 = vector.broadcast %cst_13 : f32 to vector<8x16xf32>
    %19 = arith.mulf %18, %3 : vector<8x16xf32>
    %20 = arith.subf %17, %19 : vector<8x16xf32>
    %cst_14 = arith.constant 1.275000e+02 : f32
    %21 = vector.broadcast %cst_14 : f32 to vector<8x16xf32>
    %22 = arith.mulf %21, %5 : vector<8x16xf32>
    %23 = arith.addf %20, %22 : vector<8x16xf32>
    %cst_15 = arith.constant 1.275000e+02 : f32
    %24 = vector.broadcast %cst_15 : f32 to vector<8x16xf32>
    %25 = arith.mulf %24, %1 : vector<8x16xf32>
    %cst_16 = arith.constant 106.765442 : f32
    %26 = vector.broadcast %cst_16 : f32 to vector<8x16xf32>
    %27 = arith.mulf %26, %3 : vector<8x16xf32>
    %28 = arith.subf %25, %27 : vector<8x16xf32>
    %cst_17 = arith.constant 20.73456 : f32
    %29 = vector.broadcast %cst_17 : f32 to vector<8x16xf32>
    %30 = arith.mulf %29, %5 : vector<8x16xf32>
    %31 = arith.subf %28, %30 : vector<8x16xf32>
    %c0_18 = arith.constant 0 : index
    %c0_19 = arith.constant 0 : index
    %32 = vector.load %arg4[%c0_18, %c0_19] : memref<8x8xbf16, #tpu.memory_space<vmem>>, vector<8x8xbf16>
    %c0_20 = arith.constant 0 : index
    %c0_21 = arith.constant 0 : index
    %33 = vector.load %arg5[%c0_20, %c0_21] : memref<8x8xbf16, #tpu.memory_space<vmem>>, vector<8x8xbf16>
    %c0_22 = arith.constant 0 : index
    %c0_23 = arith.constant 0 : index
    %34 = vector.load %arg6[%c0_22, %c0_23] : memref<16x16xbf16, #tpu.memory_space<vmem>>, vector<16x16xbf16>
    %c0_24 = arith.constant 0 : index
    %c0_25 = arith.constant 0 : index
    %35 = vector.load %arg7[%c0_24, %c0_25] : memref<16x16xbf16, #tpu.memory_space<vmem>>, vector<16x16xbf16>
    %36 = arith.truncf %15 : vector<8x16xf32> to vector<8x16xbf16>
    %cst_26 = arith.constant dense<0.000000e+00> : vector<8x16xf32>
    %37 = tpu.matmul %32, %36, %cst_26 {dimension_numbers = #tpu.dot_dimension_numbers<[1], [0], [0], [1], [0, 0, 1, 1], [], []>} : vector<8x8xbf16>, vector<8x16xbf16>, vector<8x16xf32> -> vector<8x16xf32>
    %38 = arith.truncf %37 : vector<8x16xf32> to vector<8x16xbf16>
    %cst_27 = arith.constant dense<0.000000e+00> : vector<8x16xf32>
    %39 = tpu.matmul %38, %34, %cst_27 {dimension_numbers = #tpu.dot_dimension_numbers<[1], [0], [0], [1], [0, 0, 1, 1], [], []>} : vector<8x16xbf16>, vector<16x16xbf16>, vector<8x16xf32> -> vector<8x16xf32>
    %c0_28 = arith.constant 0 : index
    %c0_29 = arith.constant 0 : index
    %c0_30 = arith.constant 0 : index
    %40 = vector.load %arg8[%c0_28, %c0_29, %c0_30] : memref<3x8x16xf32, #tpu.memory_space<vmem>>, vector<1x8x16xf32>
    %41 = vector.shape_cast %40 : vector<1x8x16xf32> to vector<8x16xf32>
    %42 = arith.mulf %39, %41 : vector<8x16xf32>
    %43 = math.roundeven %42 : vector<8x16xf32>
    %44 = arith.subf %42, %43 : vector<8x16xf32>
    %45 = arith.mulf %44, %44 : vector<8x16xf32>
    %46 = arith.mulf %45, %44 : vector<8x16xf32>
    %47 = arith.addf %43, %46 : vector<8x16xf32>
    %c0_31 = arith.constant 0 : index
    %c0_32 = arith.constant 0 : index
    %c0_33 = arith.constant 0 : index
    %48 = vector.load %arg9[%c0_31, %c0_32, %c0_33] : memref<3x8x16xf32, #tpu.memory_space<vmem>>, vector<1x8x16xf32>
    %49 = vector.shape_cast %48 : vector<1x8x16xf32> to vector<8x16xf32>
    %50 = arith.mulf %47, %49 : vector<8x16xf32>
    %51 = arith.truncf %50 : vector<8x16xf32> to vector<8x16xbf16>
    %cst_34 = arith.constant dense<0.000000e+00> : vector<8x16xf32>
    %52 = tpu.matmul %51, %35, %cst_34 {dimension_numbers = #tpu.dot_dimension_numbers<[1], [0], [0], [1], [0, 0, 1, 1], [], []>} : vector<8x16xbf16>, vector<16x16xbf16>, vector<8x16xf32> -> vector<8x16xf32>
    %53 = arith.truncf %52 : vector<8x16xf32> to vector<8x16xbf16>
    %cst_35 = arith.constant dense<0.000000e+00> : vector<8x16xf32>
    %54 = tpu.matmul %33, %53, %cst_35 {dimension_numbers = #tpu.dot_dimension_numbers<[1], [0], [0], [1], [0, 0, 1, 1], [], []>} : vector<8x8xbf16>, vector<8x16xbf16>, vector<8x16xf32> -> vector<8x16xf32>
    %55 = arith.truncf %23 : vector<8x16xf32> to vector<8x16xbf16>
    %cst_36 = arith.constant dense<0.000000e+00> : vector<8x16xf32>
    %56 = tpu.matmul %32, %55, %cst_36 {dimension_numbers = #tpu.dot_dimension_numbers<[1], [0], [0], [1], [0, 0, 1, 1], [], []>} : vector<8x8xbf16>, vector<8x16xbf16>, vector<8x16xf32> -> vector<8x16xf32>
    %57 = arith.truncf %56 : vector<8x16xf32> to vector<8x16xbf16>
    %cst_37 = arith.constant dense<0.000000e+00> : vector<8x16xf32>
    %58 = tpu.matmul %57, %34, %cst_37 {dimension_numbers = #tpu.dot_dimension_numbers<[1], [0], [0], [1], [0, 0, 1, 1], [], []>} : vector<8x16xbf16>, vector<16x16xbf16>, vector<8x16xf32> -> vector<8x16xf32>
    %c1_38 = arith.constant 1 : index
    %c0_39 = arith.constant 0 : index
    %c0_40 = arith.constant 0 : index
    %59 = vector.load %arg8[%c1_38, %c0_39, %c0_40] : memref<3x8x16xf32, #tpu.memory_space<vmem>>, vector<1x8x16xf32>
    %60 = vector.shape_cast %59 : vector<1x8x16xf32> to vector<8x16xf32>
    %61 = arith.mulf %58, %60 : vector<8x16xf32>
    %62 = math.roundeven %61 : vector<8x16xf32>
    %63 = arith.subf %61, %62 : vector<8x16xf32>
    %64 = arith.mulf %63, %63 : vector<8x16xf32>
    %65 = arith.mulf %64, %63 : vector<8x16xf32>
    %66 = arith.addf %62, %65 : vector<8x16xf32>
    %c1_41 = arith.constant 1 : index
    %c0_42 = arith.constant 0 : index
    %c0_43 = arith.constant 0 : index
    %67 = vector.load %arg9[%c1_41, %c0_42, %c0_43] : memref<3x8x16xf32, #tpu.memory_space<vmem>>, vector<1x8x16xf32>
    %68 = vector.shape_cast %67 : vector<1x8x16xf32> to vector<8x16xf32>
    %69 = arith.mulf %66, %68 : vector<8x16xf32>
    %70 = arith.truncf %69 : vector<8x16xf32> to vector<8x16xbf16>
    %cst_44 = arith.constant dense<0.000000e+00> : vector<8x16xf32>
    %71 = tpu.matmul %70, %35, %cst_44 {dimension_numbers = #tpu.dot_dimension_numbers<[1], [0], [0], [1], [0, 0, 1, 1], [], []>} : vector<8x16xbf16>, vector<16x16xbf16>, vector<8x16xf32> -> vector<8x16xf32>
    %72 = arith.truncf %71 : vector<8x16xf32> to vector<8x16xbf16>
    %cst_45 = arith.constant dense<0.000000e+00> : vector<8x16xf32>
    %73 = tpu.matmul %33, %72, %cst_45 {dimension_numbers = #tpu.dot_dimension_numbers<[1], [0], [0], [1], [0, 0, 1, 1], [], []>} : vector<8x8xbf16>, vector<8x16xbf16>, vector<8x16xf32> -> vector<8x16xf32>
    %74 = arith.truncf %31 : vector<8x16xf32> to vector<8x16xbf16>
    %cst_46 = arith.constant dense<0.000000e+00> : vector<8x16xf32>
    %75 = tpu.matmul %32, %74, %cst_46 {dimension_numbers = #tpu.dot_dimension_numbers<[1], [0], [0], [1], [0, 0, 1, 1], [], []>} : vector<8x8xbf16>, vector<8x16xbf16>, vector<8x16xf32> -> vector<8x16xf32>
    %76 = arith.truncf %75 : vector<8x16xf32> to vector<8x16xbf16>
    %cst_47 = arith.constant dense<0.000000e+00> : vector<8x16xf32>
    %77 = tpu.matmul %76, %34, %cst_47 {dimension_numbers = #tpu.dot_dimension_numbers<[1], [0], [0], [1], [0, 0, 1, 1], [], []>} : vector<8x16xbf16>, vector<16x16xbf16>, vector<8x16xf32> -> vector<8x16xf32>
    %c2_48 = arith.constant 2 : index
    %c0_49 = arith.constant 0 : index
    %c0_50 = arith.constant 0 : index
    %78 = vector.load %arg8[%c2_48, %c0_49, %c0_50] : memref<3x8x16xf32, #tpu.memory_space<vmem>>, vector<1x8x16xf32>
    %79 = vector.shape_cast %78 : vector<1x8x16xf32> to vector<8x16xf32>
    %80 = arith.mulf %77, %79 : vector<8x16xf32>
    %81 = math.roundeven %80 : vector<8x16xf32>
    %82 = arith.subf %80, %81 : vector<8x16xf32>
    %83 = arith.mulf %82, %82 : vector<8x16xf32>
    %84 = arith.mulf %83, %82 : vector<8x16xf32>
    %85 = arith.addf %81, %84 : vector<8x16xf32>
    %c2_51 = arith.constant 2 : index
    %c0_52 = arith.constant 0 : index
    %c0_53 = arith.constant 0 : index
    %86 = vector.load %arg9[%c2_51, %c0_52, %c0_53] : memref<3x8x16xf32, #tpu.memory_space<vmem>>, vector<1x8x16xf32>
    %87 = vector.shape_cast %86 : vector<1x8x16xf32> to vector<8x16xf32>
    %88 = arith.mulf %85, %87 : vector<8x16xf32>
    %89 = arith.truncf %88 : vector<8x16xf32> to vector<8x16xbf16>
    %cst_54 = arith.constant dense<0.000000e+00> : vector<8x16xf32>
    %90 = tpu.matmul %89, %35, %cst_54 {dimension_numbers = #tpu.dot_dimension_numbers<[1], [0], [0], [1], [0, 0, 1, 1], [], []>} : vector<8x16xbf16>, vector<16x16xbf16>, vector<8x16xf32> -> vector<8x16xf32>
    %91 = arith.truncf %90 : vector<8x16xf32> to vector<8x16xbf16>
    %cst_55 = arith.constant dense<0.000000e+00> : vector<8x16xf32>
    %92 = tpu.matmul %33, %91, %cst_55 {dimension_numbers = #tpu.dot_dimension_numbers<[1], [0], [0], [1], [0, 0, 1, 1], [], []>} : vector<8x8xbf16>, vector<8x16xbf16>, vector<8x16xf32> -> vector<8x16xf32>
    %cst_56 = arith.constant 0.00392156886 : f32
    %93 = vector.broadcast %cst_56 : f32 to vector<8x16xf32>
    %94 = arith.mulf %93, %54 : vector<8x16xf32>
    %cst_57 = arith.constant 0.00549803907 : f32
    %95 = vector.broadcast %cst_57 : f32 to vector<8x16xf32>
    %96 = arith.mulf %95, %92 : vector<8x16xf32>
    %97 = arith.addf %94, %96 : vector<8x16xf32>
    %cst_58 = arith.constant 0.501960814 : f32
    %98 = vector.broadcast %cst_58 : f32 to vector<8x16xf32>
    %99 = arith.addf %97, %98 : vector<8x16xf32>
    %cst_59 = arith.constant 0.00392156886 : f32
    %100 = vector.broadcast %cst_59 : f32 to vector<8x16xf32>
    %101 = arith.mulf %100, %54 : vector<8x16xf32>
    %cst_60 = arith.constant 0.00134955288 : f32
    %102 = vector.broadcast %cst_60 : f32 to vector<8x16xf32>
    %103 = arith.mulf %102, %73 : vector<8x16xf32>
    %104 = arith.subf %101, %103 : vector<8x16xf32>
    %cst_61 = arith.constant 0.00280053332 : f32
    %105 = vector.broadcast %cst_61 : f32 to vector<8x16xf32>
    %106 = arith.mulf %105, %92 : vector<8x16xf32>
    %107 = arith.subf %104, %106 : vector<8x16xf32>
    %cst_62 = arith.constant 0.501960814 : f32
    %108 = vector.broadcast %cst_62 : f32 to vector<8x16xf32>
    %109 = arith.addf %107, %108 : vector<8x16xf32>
    %cst_63 = arith.constant 0.00392156886 : f32
    %110 = vector.broadcast %cst_63 : f32 to vector<8x16xf32>
    %111 = arith.mulf %110, %54 : vector<8x16xf32>
    %cst_64 = arith.constant 0.00694901962 : f32
    %112 = vector.broadcast %cst_64 : f32 to vector<8x16xf32>
    %113 = arith.mulf %112, %73 : vector<8x16xf32>
    %114 = arith.addf %111, %113 : vector<8x16xf32>
    %cst_65 = arith.constant 0.501960814 : f32
    %115 = vector.broadcast %cst_65 : f32 to vector<8x16xf32>
    %116 = arith.addf %114, %115 : vector<8x16xf32>
    %cst_66 = arith.constant 0.000000e+00 : f32
    %cst_67 = arith.constant 1.000000e+00 : f32
    %117 = vector.broadcast %cst_66 : f32 to vector<8x16xf32>
    %118 = arith.maximumf %117, %99 : vector<8x16xf32>
    %119 = vector.broadcast %cst_67 : f32 to vector<8x16xf32>
    %120 = arith.minimumf %119, %118 : vector<8x16xf32>
    %c0_68 = arith.constant 0 : index
    %c0_69 = arith.constant 0 : index
    %c0_70 = arith.constant 0 : index
    %c0_71 = arith.constant 0 : index
    %121 = vector.load %arg10[%c0_68, %c0_69, %c0_70, %c0_71] : memref<1x3x8x16xf32, #tpu.memory_space<vmem>>, vector<1x1x8x16xf32>
    %122 = vector.shape_cast %121 : vector<1x1x8x16xf32> to vector<8x16xf32>
    %123 = vector.shape_cast %120 : vector<8x16xf32> to vector<1x1x8x16xf32>
    tpu.vector_store %arg10[%c0_68, %c0_69, %c0_70, %c0_71], %123 {strides = array<i32>} : memref<1x3x8x16xf32, #tpu.memory_space<vmem>>, vector<1x1x8x16xf32>,
    %cst_72 = arith.constant 0.000000e+00 : f32
    %cst_73 = arith.constant 1.000000e+00 : f32
    %124 = vector.broadcast %cst_72 : f32 to vector<8x16xf32>
    %125 = arith.maximumf %124, %109 : vector<8x16xf32>
    %126 = vector.broadcast %cst_73 : f32 to vector<8x16xf32>
    %127 = arith.minimumf %126, %125 : vector<8x16xf32>
    %c0_74 = arith.constant 0 : index
    %c1_75 = arith.constant 1 : index
    %c0_76 = arith.constant 0 : index
    %c0_77 = arith.constant 0 : index
    %128 = vector.load %arg10[%c0_74, %c1_75, %c0_76, %c0_77] : memref<1x3x8x16xf32, #tpu.memory_space<vmem>>, vector<1x1x8x16xf32>
    %129 = vector.shape_cast %128 : vector<1x1x8x16xf32> to vector<8x16xf32>
    %130 = vector.shape_cast %127 : vector<8x16xf32> to vector<1x1x8x16xf32>
    tpu.vector_store %arg10[%c0_74, %c1_75, %c0_76, %c0_77], %130 {strides = array<i32>} : memref<1x3x8x16xf32, #tpu.memory_space<vmem>>, vector<1x1x8x16xf32>,
    %cst_78 = arith.constant 0.000000e+00 : f32
    %cst_79 = arith.constant 1.000000e+00 : f32
    %131 = vector.broadcast %cst_78 : f32 to vector<8x16xf32>
    %132 = arith.maximumf %131, %116 : vector<8x16xf32>
    %133 = vector.broadcast %cst_79 : f32 to vector<8x16xf32>
    %134 = arith.minimumf %133, %132 : vector<8x16xf32>
    %c0_80 = arith.constant 0 : index
    %c2_81 = arith.constant 2 : index
    %c0_82 = arith.constant 0 : index
    %c0_83 = arith.constant 0 : index
    %135 = vector.load %arg10[%c0_80, %c2_81, %c0_82, %c0_83] : memref<1x3x8x16xf32, #tpu.memory_space<vmem>>, vector<1x1x8x16xf32>
    %136 = vector.shape_cast %135 : vector<1x1x8x16xf32> to vector<8x16xf32>
    %137 = vector.shape_cast %134 : vector<8x16xf32> to vector<1x1x8x16xf32>
    tpu.vector_store %arg10[%c0_80, %c2_81, %c0_82, %c0_83], %137 {strides = array<i32>} : memref<1x3x8x16xf32, #tpu.memory_space<vmem>>, vector<1x1x8x16xf32>,
    return
  }
  func.func @transform_0(%arg0: i32, %arg1: i32, %arg2: i32) -> (i32, i32, i32, i32) {
    %c0_i32 = arith.constant 0 : i32
    %c0_i32_0 = arith.constant 0 : i32
    return %arg0, %c0_i32, %arg1, %arg2 : i32, i32, i32, i32
  }
  func.func @transform_1(%arg0: i32, %arg1: i32, %arg2: i32) -> (i32, i32) {
    %c0_i32 = arith.constant 0 : i32
    %c0_i32_0 = arith.constant 0 : i32
    %c0_i32_1 = arith.constant 0 : i32
    return %c0_i32, %c0_i32_0 : i32, i32
  }
  func.func @transform_2(%arg0: i32, %arg1: i32, %arg2: i32) -> (i32, i32) {
    %c0_i32 = arith.constant 0 : i32
    %c0_i32_0 = arith.constant 0 : i32
    %c0_i32_1 = arith.constant 0 : i32
    return %c0_i32, %c0_i32_0 : i32, i32
  }
  func.func @transform_3(%arg0: i32, %arg1: i32, %arg2: i32) -> (i32, i32) {
    %c0_i32 = arith.constant 0 : i32
    %c0_i32_0 = arith.constant 0 : i32
    %c0_i32_1 = arith.constant 0 : i32
    return %c0_i32, %c0_i32_0 : i32, i32
  }
  func.func @transform_4(%arg0: i32, %arg1: i32, %arg2: i32) -> (i32, i32) {
    %c0_i32 = arith.constant 0 : i32
    %c0_i32_0 = arith.constant 0 : i32
    %c0_i32_1 = arith.constant 0 : i32
    return %c0_i32, %c0_i32_0 : i32, i32
  }
  func.func @transform_5(%arg0: i32, %arg1: i32, %arg2: i32) -> (i32, i32, i32) {
    %c0_i32 = arith.constant 0 : i32
    %c0_i32_0 = arith.constant 0 : i32
    %c0_i32_1 = arith.constant 0 : i32
    %c0_i32_2 = arith.constant 0 : i32
    return %c0_i32, %c0_i32_0, %c0_i32_1 : i32, i32, i32
  }
  func.func @transform_6(%arg0: i32, %arg1: i32, %arg2: i32) -> (i32, i32, i32) {
    %c0_i32 = arith.constant 0 : i32
    %c0_i32_0 = arith.constant 0 : i32
    %c0_i32_1 = arith.constant 0 : i32
    %c0_i32_2 = arith.constant 0 : i32
    return %c0_i32, %c0_i32_0, %c0_i32_1 : i32, i32, i32
  }
  func.func @transform_7(%arg0: i32, %arg1: i32, %arg2: i32) -> (i32, i32, i32, i32) {
    %c0_i32 = arith.constant 0 : i32
    %c0_i32_0 = arith.constant 0 : i32
    return %arg0, %c0_i32, %arg1, %arg2 : i32, i32, i32, i32
  }
}

</mosaic_0001>

<llo_original>
// kernel: tpu_custom_call.1
$region0: #{tpu_custom_call.1}
  #allocation0 [shape = 'u32[]', space=smem, size = 0x4, offset = 0x4, fixed_abs, tag = 'smem constant byte address 0x4 - core index']
  #allocation1 [shape = 'u32[144,128]{1,0:T(1,128)}', space=vmem, size = 0x12000, scoped, tag = 'internal scratch']
  %s0 = inlined_call_operand.hbm [shape: f32[2,3,16,16], index: 0, kind: input, shape index: {}]
  %s1 = inlined_call_operand.hbm [shape: bf16[8,8], index: 1, kind: input, shape index: {}]
  %s2 = inlined_call_operand.hbm [shape: bf16[8,8], index: 2, kind: input, shape index: {}]
  %s3 = inlined_call_operand.vmem [shape: bf16[16,16], index: 3, kind: input, shape index: {}]
  %s4 = inlined_call_operand.hbm [shape: bf16[16,16], index: 4, kind: input, shape index: {}]
  %s5 = inlined_call_operand.hbm [shape: f32[3,8,16], index: 5, kind: input, shape index: {}]
  %s6 = inlined_call_operand.hbm [shape: f32[3,8,16], index: 6, kind: input, shape index: {}]
  %s7 = inlined_call_operand.hbm [shape: f32[2,3,16,16], index: 7, kind: output, shape index: {}]
  %s8 = sld [smem:[#allocation0]]
  $region85: #{tpu_custom_call.1} parent=0
    _
  %s10 = ssub.s32 1, %s8
  %s11 = scalar_select 0, %s10, %s8
  $region1: #{tpu_custom_call.1} parent=0
    #allocation2 [shape = 'u8[24576]{0}', space=vmem, size = 0x6000, scoped, tag = 'input window, operand 0']
    #allocation3 [shape = 's32[2]{0}', space=sflag, size = 0x8, scoped, tag = 'scoped memory for tpu_custom_call.1']
    #allocation4 [shape = 's32[2]{0}', space=sflag, size = 0x8, scoped, tag = 'scoped memory for tpu_custom_call.1']
    #allocation5 [shape = 'u8[2048]{0}', space=vmem, size = 0x800, scoped, tag = 'input window, operand 1, single buffered']
    #allocation6 [shape = 's32[1]{0}', space=sflag, size = 0x4, scoped, tag = 'scoped memory for tpu_custom_call.1']
    #allocation7 [shape = 'u8[2048]{0}', space=vmem, size = 0x800, scoped, tag = 'input window, operand 2, single buffered']
    #allocation8 [shape = 'u8[4096]{0}', space=vmem, size = 0x1000, scoped, tag = 'input window, operand 4, single buffered']
    #allocation9 [shape = 's32[1]{0}', space=sflag, size = 0x4, scoped, tag = 'scoped memory for tpu_custom_call.1']
    #allocation10 [shape = 'u8[12288]{0}', space=vmem, size = 0x3000, scoped, tag = 'input window, operand 5, single buffered']
    #allocation11 [shape = 'u8[12288]{0}', space=vmem, size = 0x3000, scoped, tag = 'input window, operand 6, single buffered']
    #allocation12 [shape = 's32[1]{0}', space=sflag, size = 0x4, scoped, tag = 'scoped memory for tpu_custom_call.1']
    #allocation13 [shape = 'u8[24576]{0}', space=vmem, size = 0x6000, scoped, tag = 'output window, operand 0']
    %12 = vsyncpa [#allocation3], 0
    %s13 = scalar_lea.sflag [#allocation3], 1
    %14 = vsyncpa %s13, 0
    %15 = vsyncpa [#allocation6], 0
    %16 = vsyncpa [#allocation9], 0
    %17 = vsyncpa [#allocation12], 0
    %18 = vsyncpa [#allocation4], 0
    %s19 = scalar_lea.sflag [#allocation4], 1
    %20 = vsyncpa %s19, 0
    loop: start=0, step=1, limit=6
    $region2: #{tpu_custom_call.1} parent=1 // loop_pre_header
      _
    $region3: #{tpu_custom_call.1} parent=1 // loop_header
      %s22 = sphi 0, %s26
      %p23 = scmp.ge.s32.totalorder %s22, 6
      %s29 = sphi 0, %s48
      %s30 = sphi 0, %s44
      %s31 = sphi 0, %s40
      %s32 = sphi 0, %s29
      %s33 = sphi 0, %s30
      %s34 = sphi 0, %s31
      %s35 = sphi 0, %s32
      %s36 = sphi 0, %s33
      %s37 = sphi 0, %s34
      %s55 = sphi 0, %s57
      %s58 = sphi 0, %s55
      %s59 = sphi 0, %s58
      %s75 = sphi 0, %s59
      %s79 = sphi 0, %s79
      %s81 = sphi 0, %s79
      %s82 = sphi 0, %s81
      %s96 = sphi 0, %s82
      %s100 = sphi 0, %s100
      %s102 = sphi 0, %s100
      %s103 = sphi 0, %s102
      %s117 = sphi 0, %s103
      %s121 = sphi 0, %s121
      %s123 = sphi 0, %s121
      %s124 = sphi 0, %s123
      %s138 = sphi 0, %s124
      %s142 = sphi 0, %s142
      %s144 = sphi 0, %s142
      %s145 = sphi 0, %s144
      %s159 = sphi 0, %s145
      %s163 = sphi 0, %s163
      %s165 = sphi 0, %s163
      %s166 = sphi 0, %s165
      %s180 = sphi 0, %s166
      %s184 = sphi 0, %s184
      %s186 = sphi 0, %s184
      %s187 = sphi 0, %s186
      %s201 = sphi 0, %s187
      %s211 = sphi 0, %s213
      %s214 = sphi 0, %s211
      %s215 = sphi 0, %s214
      %s231 = sphi 0, %s215
    $region4: #{tpu_custom_call.1} parent=1 // loop_header_branch
      %25 = sbr.rel (%p23) target = $region8
    $region5: #{tpu_custom_call.1} parent=1 // loop_body
      %s27 = ssub.s32 %s22, 1
      %s28 = ssub.s32 %s22, 2
      %s38 = sadd.s32 1, %s31
      %p39 = scmp.ge.s32.totalorder %s38, 1
      %s40 = scalar_select %p39, 0, %s38
      %s41 = sadd.s32 1, %s30
      %s42 = scalar_select %p39, %s41, %s30
      %p43 = scmp.ge.s32.totalorder %s42, 2
      %s44 = scalar_select %p43, 0, %s42
      %s45 = sadd.s32 1, %s29
      %s46 = scalar_select %p43, %s45, %s29
      %p47 = scmp.ge.s32.totalorder %s46, 2
      %s48 = scalar_select %p47, 0, %s46
      %s49 = ssub.s32 %s29, %s48
      %s50 = ssub.s32 %s30, %s44
      %s51 = sor.u32 %s49, %s50
      %s52 = ssub.s32 %s31, %s40
      %s53 = sor.u32 %s51, %s52
      %p54 = scmp.eq.s32.totalorder %s53, 0
      %s56 = sadd.s32 %s55, 1
      %s57 = scalar_select %p54, %s55, %s56
      %p60 = pneg %p54
      %p61 = scmp.eq.s32.totalorder %s22, 3
      %p62 = por %p60, %p61
      %p63 = scmp.ne.s32.totalorder %s55, %s58
      %p64 = scmp.eq.s32.totalorder %s22, 0
      %p65 = por %p63, %p64
      %p66 = scmp.ne.s32.totalorder %s55, %s58
      %p67 = scmp.eq.s32.totalorder %s27, 3
      %p68 = por %p66, %p67
      %p69 = scmp.ne.s32.totalorder %s58, %s59
      %p70 = scmp.eq.s32.totalorder %s27, 0
      %p71 = por %p69, %p70
      %p72 = scmp.ne.s32.totalorder %s58, %s59
      %p73 = scmp.eq.s32.totalorder %s28, 3
      %p74 = por %p72, %p73
      %p76 = scmp.ne.s32.totalorder %s59, %s75
      %p77 = scmp.eq.s32.totalorder %s28, 0
      %p78 = por %p76, %p77
      %s80 = sadd.s32 %s79, 1
      %p83 = scmp.eq.s32.totalorder %s22, 3
      %p84 = scmp.ne.s32.totalorder %s79, %s81
      %p85 = scmp.eq.s32.totalorder %s22, 0
      %p86 = por %p84, %p85
      %p87 = scmp.ne.s32.totalorder %s79, %s81
      %p88 = scmp.eq.s32.totalorder %s27, 3
      %p89 = por %p87, %p88
      %p90 = scmp.ne.s32.totalorder %s81, %s82
      %p91 = scmp.eq.s32.totalorder %s27, 0
      %p92 = por %p90, %p91
      %p93 = scmp.ne.s32.totalorder %s81, %s82
      %p94 = scmp.eq.s32.totalorder %s28, 3
      %p95 = por %p93, %p94
      %p97 = scmp.ne.s32.totalorder %s82, %s96
      %p98 = scmp.eq.s32.totalorder %s28, 0
      %p99 = por %p97, %p98
      %s101 = sadd.s32 %s100, 1
      %p104 = scmp.eq.s32.totalorder %s22, 3
      %p105 = scmp.ne.s32.totalorder %s100, %s102
      %p106 = scmp.eq.s32.totalorder %s22, 0
      %p107 = por %p105, %p106
      %p108 = scmp.ne.s32.totalorder %s100, %s102
      %p109 = scmp.eq.s32.totalorder %s27, 3
      %p110 = por %p108, %p109
      %p111 = scmp.ne.s32.totalorder %s102, %s103
      %p112 = scmp.eq.s32.totalorder %s27, 0
      %p113 = por %p111, %p112
      %p114 = scmp.ne.s32.totalorder %s102, %s103
      %p115 = scmp.eq.s32.totalorder %s28, 3
      %p116 = por %p114, %p115
      %p118 = scmp.ne.s32.totalorder %s103, %s117
      %p119 = scmp.eq.s32.totalorder %s28, 0
      %p120 = por %p118, %p119
      %s122 = sadd.s32 %s121, 1
      %p125 = scmp.eq.s32.totalorder %s22, 3
      %p126 = scmp.ne.s32.totalorder %s121, %s123
      %p127 = scmp.eq.s32.totalorder %s22, 0
      %p128 = por %p126, %p127
      %p129 = scmp.ne.s32.totalorder %s121, %s123
      %p130 = scmp.eq.s32.totalorder %s27, 3
      %p131 = por %p129, %p130
      %p132 = scmp.ne.s32.totalorder %s123, %s124
      %p133 = scmp.eq.s32.totalorder %s27, 0
      %p134 = por %p132, %p133
      %p135 = scmp.ne.s32.totalorder %s123, %s124
      %p136 = scmp.eq.s32.totalorder %s28, 3
      %p137 = por %p135, %p136
      %p139 = scmp.ne.s32.totalorder %s124, %s138
      %p140 = scmp.eq.s32.totalorder %s28, 0
      %p141 = por %p139, %p140
      %s143 = sadd.s32 %s142, 1
      %p146 = scmp.eq.s32.totalorder %s22, 3
      %p147 = scmp.ne.s32.totalorder %s142, %s144
      %p148 = scmp.eq.s32.totalorder %s22, 0
      %p149 = por %p147, %p148
      %p150 = scmp.ne.s32.totalorder %s142, %s144
      %p151 = scmp.eq.s32.totalorder %s27, 3
      %p152 = por %p150, %p151
      %p153 = scmp.ne.s32.totalorder %s144, %s145
      %p154 = scmp.eq.s32.totalorder %s27, 0
      %p155 = por %p153, %p154
      %p156 = scmp.ne.s32.totalorder %s144, %s145
      %p157 = scmp.eq.s32.totalorder %s28, 3
      %p158 = por %p156, %p157
      %p160 = scmp.ne.s32.totalorder %s145, %s159
      %p161 = scmp.eq.s32.totalorder %s28, 0
      %p162 = por %p160, %p161
      %s164 = sadd.s32 %s163, 1
      %p167 = scmp.eq.s32.totalorder %s22, 3
      %p168 = scmp.ne.s32.totalorder %s163, %s165
      %p169 = scmp.eq.s32.totalorder %s22, 0
      %p170 = por %p168, %p169
      %p171 = scmp.ne.s32.totalorder %s163, %s165
      %p172 = scmp.eq.s32.totalorder %s27, 3
      %p173 = por %p171, %p172
      %p174 = scmp.ne.s32.totalorder %s165, %s166
      %p175 = scmp.eq.s32.totalorder %s27, 0
      %p176 = por %p174, %p175
      %p177 = scmp.ne.s32.totalorder %s165, %s166
      %p178 = scmp.eq.s32.totalorder %s28, 3
      %p179 = por %p177, %p178
      %p181 = scmp.ne.s32.totalorder %s166, %s180
      %p182 = scmp.eq.s32.totalorder %s28, 0
      %p183 = por %p181, %p182
      %s185 = sadd.s32 %s184, 1
      %p188 = scmp.eq.s32.totalorder %s22, 3
      %p189 = scmp.ne.s32.totalorder %s184, %s186
      %p190 = scmp.eq.s32.totalorder %s22, 0
      %p191 = por %p189, %p190
      %p192 = scmp.ne.s32.totalorder %s184, %s186
      %p193 = scmp.eq.s32.totalorder %s27, 3
      %p194 = por %p192, %p193
      %p195 = scmp.ne.s32.totalorder %s186, %s187
      %p196 = scmp.eq.s32.totalorder %s27, 0
      %p197 = por %p195, %p196
      %p198 = scmp.ne.s32.totalorder %s186, %s187
      %p199 = scmp.eq.s32.totalorder %s28, 3
      %p200 = por %p198, %p199
      %p202 = scmp.ne.s32.totalorder %s187, %s201
      %p203 = scmp.eq.s32.totalorder %s28, 0
      %p204 = por %p202, %p203
      %s205 = ssub.s32 %s29, %s48
      %s206 = ssub.s32 %s30, %s44
      %s207 = sor.u32 %s205, %s206
      %s208 = ssub.s32 %s31, %s40
      %s209 = sor.u32 %s207, %s208
      %p210 = scmp.eq.s32.totalorder %s209, 0
      %s212 = sadd.s32 %s211, 1
      %s213 = scalar_select %p210, %s211, %s212
      %p216 = pneg %p210
      %p217 = scmp.eq.s32.totalorder %s22, 3
      %p218 = por %p216, %p217
      %p219 = scmp.ne.s32.totalorder %s211, %s214
      %p220 = scmp.eq.s32.totalorder %s22, 0
      %p221 = por %p219, %p220
      %p222 = scmp.ne.s32.totalorder %s211, %s214
      %p223 = scmp.eq.s32.totalorder %s27, 3
      %p224 = por %p222, %p223
      %p225 = scmp.ne.s32.totalorder %s214, %s215
      %p226 = scmp.eq.s32.totalorder %s27, 0
      %p227 = por %p225, %p226
      %p228 = scmp.ne.s32.totalorder %s214, %s215
      %p229 = scmp.eq.s32.totalorder %s28, 3
      %p230 = por %p228, %p229
      %p232 = scmp.ne.s32.totalorder %s215, %s231
      %p233 = scmp.eq.s32.totalorder %s28, 0
      %p234 = por %p232, %p233
      %p235 = scmp.le.s32.totalorder 1, %s22
      %p236 = scmp.lt.s32.totalorder %s22, 5
      %p237 = pnand %p235, %p236
      %p238 = pneg %p237
      // Predicated region
      $region9: #{tpu_custom_call.1} parent=5 // pred_check
        _
      $region10: #{tpu_custom_call.1} parent=5 // pred_check_branch
        %240 = sbr.rel (%p237) target = $region12
      $region11: #{tpu_custom_call.1} parent=5 // pred_region
        %s241 = ssub.s32 %s22, 1
        // Predicated region
        $region13: #{tpu_custom_call.1} parent=11 // pred_check
          %p242 = pneg %p92
        $region14: #{tpu_custom_call.1} parent=11 // pred_check_branch
          %244 = sbr.rel (%p242) target = $region16
        $region15: #{tpu_custom_call.1} parent=11 // pred_region
          %s246 = ssub.s32 64, 64
          %247 = vsyncadd [#allocation6], %s246
          %s249 = sshll.u32 [#allocation5], 4
          %s250 = int_to_ptr.vmem [resolvable:$true] %s249
          %252 = dma.hbm_to_vmem [thread:$0]  %s1, 64, %s250, [#allocation6]
        $region16: #{tpu_custom_call.1} parent=11 // pred_fallthru
          _
        // Predicated region
        $region17: #{tpu_custom_call.1} parent=11 // pred_check
          %p253 = pneg %p113
        $region18: #{tpu_custom_call.1} parent=11 // pred_check_branch
          %255 = sbr.rel (%p253) target = $region20
        $region19: #{tpu_custom_call.1} parent=11 // pred_region
          %s257 = ssub.s32 64, 64
          %258 = vsyncadd [#allocation6], %s257
          %s260 = sshll.u32 [#allocation7], 4
          %s261 = int_to_ptr.vmem [resolvable:$true] %s260
          %263 = dma.hbm_to_vmem [thread:$0]  %s2, 64, %s261, [#allocation6]
        $region20: #{tpu_custom_call.1} parent=11 // pred_fallthru
          _
        // Predicated region
        $region21: #{tpu_custom_call.1} parent=11 // pred_check
          %p264 = pneg %p134
        $region22: #{tpu_custom_call.1} parent=11 // pred_check_branch
          %266 = sbr.rel (%p264) target = $region24
        $region23: #{tpu_custom_call.1} parent=11 // pred_region
          _
        $region24: #{tpu_custom_call.1} parent=11 // pred_fallthru
          _
        // Predicated region
        $region25: #{tpu_custom_call.1} parent=11 // pred_check
          %p267 = pneg %p155
        $region26: #{tpu_custom_call.1} parent=11 // pred_check_branch
          %269 = sbr.rel (%p267) target = $region28
        $region27: #{tpu_custom_call.1} parent=11 // pred_region
          %s271 = ssub.s32 128, 128
          %272 = vsyncadd [#allocation9], %s271
          %s273 = sshll.u32 [#allocation8], 4
          %s274 = int_to_ptr.vmem [resolvable:$true] %s273
          %279 = dma.hbm_to_vmem [thread:$0]  %s4, 128, %s274, [#allocation9], 64, 64, 4
        $region28: #{tpu_custom_call.1} parent=11 // pred_fallthru
          _
        // Predicated region
        $region29: #{tpu_custom_call.1} parent=11 // pred_check
          %p280 = pneg %p176
        $region30: #{tpu_custom_call.1} parent=11 // pred_check_branch
          %282 = sbr.rel (%p280) target = $region32
        $region31: #{tpu_custom_call.1} parent=11 // pred_region
          %s284 = ssub.s32 384, 384
          %285 = vsyncadd [#allocation9], %s284
          %s286 = sshll.u32 [#allocation10], 4
          %s287 = int_to_ptr.vmem [resolvable:$true] %s286
          %292 = dma.hbm_to_vmem [thread:$0]  %s5, 384, %s287, [#allocation9], 128, 128, 8
        $region32: #{tpu_custom_call.1} parent=11 // pred_fallthru
          _
        // Predicated region
        $region33: #{tpu_custom_call.1} parent=11 // pred_check
          %p293 = pneg %p197
        $region34: #{tpu_custom_call.1} parent=11 // pred_check_branch
          %295 = sbr.rel (%p293) target = $region36
        $region35: #{tpu_custom_call.1} parent=11 // pred_region
          %s297 = ssub.s32 384, 384
          %298 = vsyncadd [#allocation12], %s297
          %s299 = sshll.u32 [#allocation11], 4
          %s300 = int_to_ptr.vmem [resolvable:$true] %s299
          %305 = dma.hbm_to_vmem [thread:$0]  %s6, 384, %s300, [#allocation12], 128, 128, 8
        $region36: #{tpu_custom_call.1} parent=11 // pred_fallthru
          _
      $region12: #{tpu_custom_call.1} parent=5 // pred_fallthru
        _
      %p306 = scmp.lt.s32.totalorder %s22, 4
      // Predicated region
      $region37: #{tpu_custom_call.1} parent=5 // pred_check
        %p307 = pneg %p306
      $region38: #{tpu_custom_call.1} parent=5 // pred_check_branch
        %309 = sbr.rel (%p307) target = $region40
      $region39: #{tpu_custom_call.1} parent=5 // pred_region
        // Predicated region
        $region41: #{tpu_custom_call.1} parent=39 // pred_check
          %p310 = pneg %p65
        $region42: #{tpu_custom_call.1} parent=39 // pred_check_branch
          %312 = sbr.rel (%p310) target = $region44
        $region43: #{tpu_custom_call.1} parent=39 // pred_region
          %s313 = sand.u32 %s55, 1
          %s314 = scalar_lea.sflag [#allocation3], %s313
          %s315 = sand.u32 %s55, 1
          %s316 = smul.addr %s315, 24
          %s317 = scalar_lea.vmem [#allocation2], %s316
          %s319 = ssub.s32 384, 384
          %320 = vsyncadd %s314, %s319
          %s321 = sadd.s32 %s31, %s30
          %s322 = smul.addr %s29, 6
          %s323 = sadd.s32 %s321, %s322
          %s324 = smul.addr %s323, 128
          %s325 = scalar_lea.hbm %s0, %s324
          %s326 = sshll.u32 %s317, 4
          %s327 = int_to_ptr.vmem [resolvable:$true] %s326
          %332 = dma.hbm_to_vmem [thread:$0]  %s325, 384, %s327, %s314, 256, 128, 8
        $region44: #{tpu_custom_call.1} parent=39 // pred_fallthru
          _
      $region40: #{tpu_custom_call.1} parent=5 // pred_fallthru
        _
      %p333 = scmp.le.s32.totalorder 1, %s22
      %p334 = scmp.lt.s32.totalorder %s22, 5
      %p335 = pnand %p333, %p334
      %p336 = pneg %p335
      // Predicated region
      $region45: #{tpu_custom_call.1} parent=5 // pred_check
        _
      $region46: #{tpu_custom_call.1} parent=5 // pred_check_branch
        %338 = sbr.rel (%p335) target = $region48
      $region47: #{tpu_custom_call.1} parent=5 // pred_region
        %s339 = ssub.s32 %s22, 1
        %s340 = sand.u32 %s58, 1
        %s341 = scalar_lea.sflag [#allocation3], %s340
        %s342 = sand.u32 %s58, 1
        %s343 = smul.addr %s342, 24
        %s344 = scalar_lea.vmem [#allocation2], %s343
        // Predicated region
        $region49: #{tpu_custom_call.1} parent=47 // pred_check
          %p345 = pneg %p71
        $region50: #{tpu_custom_call.1} parent=47 // pred_check_branch
          %347 = sbr.rel (%p345) target = $region52
        $region51: #{tpu_custom_call.1} parent=47 // pred_region
          %348 = dma.done %s341, 384
        $region52: #{tpu_custom_call.1} parent=47 // pred_fallthru
          _
        // Predicated region
        $region53: #{tpu_custom_call.1} parent=47 // pred_check
          %p349 = pneg %p92
        $region54: #{tpu_custom_call.1} parent=47 // pred_check_branch
          %351 = sbr.rel (%p349) target = $region56
        $region55: #{tpu_custom_call.1} parent=47 // pred_region
          %352 = dma.done [#allocation6], 64
        $region56: #{tpu_custom_call.1} parent=47 // pred_fallthru
          _
        // Predicated region
        $region57: #{tpu_custom_call.1} parent=47 // pred_check
          %p353 = pneg %p113
        $region58: #{tpu_custom_call.1} parent=47 // pred_check_branch
          %355 = sbr.rel (%p353) target = $region60
        $region59: #{tpu_custom_call.1} parent=47 // pred_region
          %356 = dma.done [#allocation6], 64
        $region60: #{tpu_custom_call.1} parent=47 // pred_fallthru
          _
        // Predicated region
        $region61: #{tpu_custom_call.1} parent=47 // pred_check
          %p357 = pneg %p155
        $region62: #{tpu_custom_call.1} parent=47 // pred_check_branch
          %359 = sbr.rel (%p357) target = $region64
        $region63: #{tpu_custom_call.1} parent=47 // pred_region
          %360 = dma.done [#allocation9], 128
        $region64: #{tpu_custom_call.1} parent=47 // pred_fallthru
          _
        // Predicated region
        $region65: #{tpu_custom_call.1} parent=47 // pred_check
          %p361 = pneg %p176
        $region66: #{tpu_custom_call.1} parent=47 // pred_check_branch
          %363 = sbr.rel (%p361) target = $region68
        $region67: #{tpu_custom_call.1} parent=47 // pred_region
          %364 = dma.done [#allocation9], 384
        $region68: #{tpu_custom_call.1} parent=47 // pred_fallthru
          _
        // Predicated region
        $region69: #{tpu_custom_call.1} parent=47 // pred_check
          %p365 = pneg %p197
        $region70: #{tpu_custom_call.1} parent=47 // pred_check_branch
          %367 = sbr.rel (%p365) target = $region72
        $region71: #{tpu_custom_call.1} parent=47 // pred_region
          %368 = dma.done [#allocation12], 384
        $region72: #{tpu_custom_call.1} parent=47 // pred_fallthru
          _
        %s369 = sand.u32 %s58, 1
        %s370 = scalar_lea.sflag [#allocation3], %s369
        %s371 = sand.u32 %s58, 1
        %s372 = smul.addr %s371, 24
        %s373 = scalar_lea.vmem [#allocation2], %s372
        %p374 = pneg %p71
        %p375 = pneg %p68
        %p376 = pneg %p92
        %p377 = pneg %p89
        %p378 = pneg %p113
        %p379 = pneg %p110
        %p380 = pneg %p134
        %p381 = pneg %p131
        %p382 = pneg %p155
        %p383 = pneg %p152
        %p384 = pneg %p176
        %p385 = pneg %p173
        %p386 = pneg %p197
        %p387 = pneg %p194
        %p388 = pneg %p227
        %p389 = pneg %p224
        %s390 = sand.u32 %s214, 1
        %s391 = scalar_lea.sflag [#allocation4], %s390
        %s392 = sand.u32 %s214, 1
        %s393 = smul.addr %s392, 24
        %s394 = scalar_lea.vmem [#allocation13], %s393
        %v396 = vld [vmem:[%s344] sm:$0xff]
        %s397 = scalar_lea.vmem %s344, 8 [#allocation2]
        %v398 = vld [vmem:[%s397] sm:$0xff]
        %s399 = scalar_lea.vmem %s344, 16 [#allocation2]
        %v400 = vld [vmem:[%s399] sm:$0xff]
        %v401 = vmul.f32 %v396, 76.245
        %v402 = vmul.f32 %v398, 149.685
        %v403 = vadd.f32 %v401, %v402
        %v404 = vmul.f32 %v400, 29.07
        %v405 = vadd.f32 %v403, %v404
        %v406 = vsub.f32 %v405, 128.0
        %v407 = vmul.f32 %v396, -43.02768
        %v408 = vmul.f32 %v398, 84.47232
        %v409 = vsub.f32 %v407, %v408
        %v410 = vmul.f32 %v400, 127.5
        %v411 = vadd.f32 %v409, %v410
        %v412 = vmul.f32 %v396, 127.5
        %v413 = vmul.f32 %v398, 106.76544
        %v414 = vsub.f32 %v412, %v413
        %v415 = vmul.f32 %v400, 20.73456
        %v416 = vsub.f32 %v414, %v415
        %v417 = vld [vmem:[#allocation5] sm:$0xf]
        %v418 = vld [vmem:[#allocation7] sm:$0xf]
        %v419 = vld [vmem:[%s3] sm:$0xf]
        %v420 = vld [vmem:[%s3 + $0x4] sm:$0xf]
        %v421 = vld [vmem:[#allocation8] sm:$0xf]
        %v422 = vld [vmem:[#allocation8 + $0x4] sm:$0xf]
        %v423 = vpack.c.bf16 %v406, %v406
        %vm424 = vcmask 64512
        %v426 = vsel %vm424, %v417, 0
        %vm428 = vcmask 1043456
        %v430 = vsel %vm428, %v423, 0
        %432 = vmatprep.subr.bf16.mxu0 0
        %433 = vmatpush1.bf16.msra.mxu0 %v430
        %434 = vmatprep.subr.bf16.mxu0 0
        %435 = vmatpush1.bf16.msra.mxu0 0
        %436 = vmatprep.subr.bf16.mxu0 0
        %437 = vmatpush1.bf16.msra.mxu0 0
        %438 = vmatprep.subr.bf16.mxu0 0
        %439 = vmatpush1.bf16.msra.mxu0 0
        %440 = vmatprep.subr.bf16.mxu0 0
        %441 = vmatpush1.bf16.msra.mxu0 0
        %442 = vmatprep.subr.bf16.mxu0 0
        %443 = vmatpush1.bf16.msra.mxu0 0
        %444 = vmatprep.subr.bf16.mxu0 0
        %445 = vmatpush1.bf16.msra.mxu0 0
        %446 = vmatprep.subr.bf16.mxu0 0
        %447 = vmatpush1.bf16.msra.mxu0 0
        %448 = vmatprep.subr.bf16.mxu0 0
        %449 = vmatpush1.bf16.msra.mxu0 0
        %450 = vmatprep.subr.bf16.mxu0 0
        %451 = vmatpush1.bf16.msra.mxu0 0
        %452 = vmatprep.subr.bf16.mxu0 0
        %453 = vmatpush1.bf16.msra.mxu0 0
        %454 = vmatprep.subr.bf16.mxu0 0
        %455 = vmatpush1.bf16.msra.mxu0 0
        %456 = vmatprep.subr.bf16.mxu0 0
        %457 = vmatpush1.bf16.msra.mxu0 0
        %458 = vmatprep.subr.bf16.mxu0 0
        %459 = vmatpush1.bf16.msra.mxu0 0
        %460 = vmatprep.subr.bf16.mxu0 0
        %461 = vmatpush1.bf16.msra.mxu0 0
        %462 = vmatprep.subr.bf16.mxu0 0
        %463 = vmatpush1.bf16.msra.mxu0 0
        %464 = vmatprep.mubr.bf16.mxu0 0
        %465 = vmatmul.mubr.bf16.gmra.mrb[0].mxu0 %v426
        %v466 = vpop.f32.mrb[0].mxu0
        %v467 = vadd.f32 0.0, %v466
        %v468 = vpop.f32.mrb[0].mxu0
        %v469 = vpop.f32.mrb[0].mxu0
        %v470 = vpop.f32.mrb[0].mxu0
        %471 = vdwg.mxu0
        %v472 = vpack.c.bf16 %v467, %v467
        %v475 = vunpack.c.l.b16 %v419
        %v476 = vunpack.c.l.b16 %v420
        %v477 = vpack.c.b16 %v476, %v475
        %vm479 = vcmask 130048
        %v481 = vsel %vm479, %v472, 0
        %483 = vmatprep.subr.bf16.mxu0 0
        %484 = vmatpush1.bf16.msra.mxu0 %v477
        %485 = vmatprep.subr.bf16.mxu0 0
        %486 = vmatpush1.bf16.msra.mxu0 0
        %487 = vmatprep.subr.bf16.mxu0 0
        %488 = vmatpush1.bf16.msra.mxu0 0
        %489 = vmatprep.subr.bf16.mxu0 0
        %490 = vmatpush1.bf16.msra.mxu0 0
        %491 = vmatprep.subr.bf16.mxu0 0
        %492 = vmatpush1.bf16.msra.mxu0 0
        %493 = vmatprep.subr.bf16.mxu0 0
        %494 = vmatpush1.bf16.msra.mxu0 0
        %495 = vmatprep.subr.bf16.mxu0 0
        %496 = vmatpush1.bf16.msra.mxu0 0
        %497 = vmatprep.subr.bf16.mxu0 0
        %498 = vmatpush1.bf16.msra.mxu0 0
        %499 = vmatprep.subr.bf16.mxu0 0
        %500 = vmatpush1.bf16.msra.mxu0 0
        %501 = vmatprep.subr.bf16.mxu0 0
        %502 = vmatpush1.bf16.msra.mxu0 0
        %503 = vmatprep.subr.bf16.mxu0 0
        %504 = vmatpush1.bf16.msra.mxu0 0
        %505 = vmatprep.subr.bf16.mxu0 0
        %506 = vmatpush1.bf16.msra.mxu0 0
        %507 = vmatprep.subr.bf16.mxu0 0
        %508 = vmatpush1.bf16.msra.mxu0 0
        %509 = vmatprep.subr.bf16.mxu0 0
        %510 = vmatpush1.bf16.msra.mxu0 0
        %511 = vmatprep.subr.bf16.mxu0 0
        %512 = vmatpush1.bf16.msra.mxu0 0
        %513 = vmatprep.subr.bf16.mxu0 0
        %514 = vmatpush1.bf16.msra.mxu0 0
        %515 = vmatprep.mubr.bf16.mxu0 0
        %516 = vmatmul.mubr.bf16.gmra.mrb[0].mxu0 %v481
        %v517 = vpop.f32.mrb[0].mxu0
        %v518 = vadd.f32 0.0, %v517
        %v519 = vpop.f32.mrb[0].mxu0
        %v520 = vpop.f32.mrb[0].mxu0
        %v521 = vpop.f32.mrb[0].mxu0
        %522 = vdwg.mxu0
        %v523 = vld [vmem:[#allocation10] sm:$0xff]
        %v524 = vmul.f32 %v518, %v523
        %v525 = vround.ne.pseudo %v524
        %v526 = vsub.f32 %v524, %v525
        %v527 = vmul.f32 %v526, %v526
        %v528 = vmul.f32 %v527, %v526
        %v529 = vadd.f32 %v525, %v528
        %v530 = vld [vmem:[#allocation11] sm:$0xff]
        %v531 = vmul.f32 %v529, %v530
        %v532 = vpack.c.bf16 %v531, %v531
        %v535 = vunpack.c.l.b16 %v421
        %v536 = vunpack.c.l.b16 %v422
        %v537 = vpack.c.b16 %v536, %v535
        %v540 = vsel %vm479, %v532, 0
        %542 = vmatprep.subr.bf16.mxu0 0
        %543 = vmatpush1.bf16.msra.mxu0 %v537
        %544 = vmatprep.subr.bf16.mxu0 0
        %545 = vmatpush1.bf16.msra.mxu0 0
        %546 = vmatprep.subr.bf16.mxu0 0
        %547 = vmatpush1.bf16.msra.mxu0 0
        %548 = vmatprep.subr.bf16.mxu0 0
        %549 = vmatpush1.bf16.msra.mxu0 0
        %550 = vmatprep.subr.bf16.mxu0 0
        %551 = vmatpush1.bf16.msra.mxu0 0
        %552 = vmatprep.subr.bf16.mxu0 0
        %553 = vmatpush1.bf16.msra.mxu0 0
        %554 = vmatprep.subr.bf16.mxu0 0
        %555 = vmatpush1.bf16.msra.mxu0 0
        %556 = vmatprep.subr.bf16.mxu0 0
        %557 = vmatpush1.bf16.msra.mxu0 0
        %558 = vmatprep.subr.bf16.mxu0 0
        %559 = vmatpush1.bf16.msra.mxu0 0
        %560 = vmatprep.subr.bf16.mxu0 0
        %561 = vmatpush1.bf16.msra.mxu0 0
        %562 = vmatprep.subr.bf16.mxu0 0
        %563 = vmatpush1.bf16.msra.mxu0 0
        %564 = vmatprep.subr.bf16.mxu0 0
        %565 = vmatpush1.bf16.msra.mxu0 0
        %566 = vmatprep.subr.bf16.mxu0 0
        %567 = vmatpush1.bf16.msra.mxu0 0
        %568 = vmatprep.subr.bf16.mxu0 0
        %569 = vmatpush1.bf16.msra.mxu0 0
        %570 = vmatprep.subr.bf16.mxu0 0
        %571 = vmatpush1.bf16.msra.mxu0 0
        %572 = vmatprep.subr.bf16.mxu0 0
        %573 = vmatpush1.bf16.msra.mxu0 0
        %574 = vmatprep.mubr.bf16.mxu0 0
        %575 = vmatmul.mubr.bf16.gmra.mrb[0].mxu0 %v540
        %v576 = vpop.f32.mrb[0].mxu0
        %v577 = vadd.f32 0.0, %v576
        %v578 = vpop.f32.mrb[0].mxu0
        %v579 = vpop.f32.mrb[0].mxu0
        %v580 = vpop.f32.mrb[0].mxu0
        %581 = vdwg.mxu0
        %v582 = vpack.c.bf16 %v577, %v577
        %v584 = vsel %vm424, %v418, 0
        %v587 = vsel %vm428, %v582, 0
        %589 = vmatprep.subr.bf16.mxu0 0
        %590 = vmatpush1.bf16.msra.mxu0 %v587
        %591 = vmatprep.subr.bf16.mxu0 0
        %592 = vmatpush1.bf16.msra.mxu0 0
        %593 = vmatprep.subr.bf16.mxu0 0
        %594 = vmatpush1.bf16.msra.mxu0 0
        %595 = vmatprep.subr.bf16.mxu0 0
        %596 = vmatpush1.bf16.msra.mxu0 0
        %597 = vmatprep.subr.bf16.mxu0 0
        %598 = vmatpush1.bf16.msra.mxu0 0
        %599 = vmatprep.subr.bf16.mxu0 0
        %600 = vmatpush1.bf16.msra.mxu0 0
        %601 = vmatprep.subr.bf16.mxu0 0
        %602 = vmatpush1.bf16.msra.mxu0 0
        %603 = vmatprep.subr.bf16.mxu0 0
        %604 = vmatpush1.bf16.msra.mxu0 0
        %605 = vmatprep.subr.bf16.mxu0 0
        %606 = vmatpush1.bf16.msra.mxu0 0
        %607 = vmatprep.subr.bf16.mxu0 0
        %608 = vmatpush1.bf16.msra.mxu0 0
        %609 = vmatprep.subr.bf16.mxu0 0
        %610 = vmatpush1.bf16.msra.mxu0 0
        %611 = vmatprep.subr.bf16.mxu0 0
        %612 = vmatpush1.bf16.msra.mxu0 0
        %613 = vmatprep.subr.bf16.mxu0 0
        %614 = vmatpush1.bf16.msra.mxu0 0
        %615 = vmatprep.subr.bf16.mxu0 0
        %616 = vmatpush1.bf16.msra.mxu0 0
        %617 = vmatprep.subr.bf16.mxu0 0
        %618 = vmatpush1.bf16.msra.mxu0 0
        %619 = vmatprep.subr.bf16.mxu0 0
        %620 = vmatpush1.bf16.msra.mxu0 0
        %621 = vmatprep.mubr.bf16.mxu0 0
        %622 = vmatmul.mubr.bf16.gmra.mrb[0].mxu0 %v584
        %v623 = vpop.f32.mrb[0].mxu0
        %v624 = vadd.f32 0.0, %v623
        %v625 = vpop.f32.mrb[0].mxu0
        %v626 = vpop.f32.mrb[0].mxu0
        %v627 = vpop.f32.mrb[0].mxu0
        %628 = vdwg.mxu0
        %v629 = vpack.c.bf16 %v411, %v411
        %v631 = vsel %vm428, %v629, 0
        %633 = vmatprep.subr.bf16.mxu0 0
        %634 = vmatpush1.bf16.msra.mxu0 %v631
        %635 = vmatprep.subr.bf16.mxu0 0
        %636 = vmatpush1.bf16.msra.mxu0 0
        %637 = vmatprep.subr.bf16.mxu0 0
        %638 = vmatpush1.bf16.msra.mxu0 0
        %639 = vmatprep.subr.bf16.mxu0 0
        %640 = vmatpush1.bf16.msra.mxu0 0
        %641 = vmatprep.subr.bf16.mxu0 0
        %642 = vmatpush1.bf16.msra.mxu0 0
        %643 = vmatprep.subr.bf16.mxu0 0
        %644 = vmatpush1.bf16.msra.mxu0 0
        %645 = vmatprep.subr.bf16.mxu0 0
        %646 = vmatpush1.bf16.msra.mxu0 0
        %647 = vmatprep.subr.bf16.mxu0 0
        %648 = vmatpush1.bf16.msra.mxu0 0
        %649 = vmatprep.subr.bf16.mxu0 0
        %650 = vmatpush1.bf16.msra.mxu0 0
        %651 = vmatprep.subr.bf16.mxu0 0
        %652 = vmatpush1.bf16.msra.mxu0 0
        %653 = vmatprep.subr.bf16.mxu0 0
        %654 = vmatpush1.bf16.msra.mxu0 0
        %655 = vmatprep.subr.bf16.mxu0 0
        %656 = vmatpush1.bf16.msra.mxu0 0
        %657 = vmatprep.subr.bf16.mxu0 0
        %658 = vmatpush1.bf16.msra.mxu0 0
        %659 = vmatprep.subr.bf16.mxu0 0
        %660 = vmatpush1.bf16.msra.mxu0 0
        %661 = vmatprep.subr.bf16.mxu0 0
        %662 = vmatpush1.bf16.msra.mxu0 0
        %663 = vmatprep.subr.bf16.mxu0 0
        %664 = vmatpush1.bf16.msra.mxu0 0
        %665 = vmatprep.mubr.bf16.mxu0 0
        %666 = vmatmul.mubr.bf16.gmra.mrb[0].mxu0 %v426
        %v667 = vpop.f32.mrb[0].mxu0
        %v668 = vadd.f32 0.0, %v667
        %v669 = vpop.f32.mrb[0].mxu0
        %v670 = vpop.f32.mrb[0].mxu0
        %v671 = vpop.f32.mrb[0].mxu0
        %672 = vdwg.mxu0
        %v673 = vpack.c.bf16 %v668, %v668
        %v675 = vsel %vm479, %v673, 0
        %677 = vmatprep.subr.bf16.mxu0 0
        %678 = vmatpush1.bf16.msra.mxu0 %v477
        %679 = vmatprep.subr.bf16.mxu0 0
        %680 = vmatpush1.bf16.msra.mxu0 0
        %681 = vmatprep.subr.bf16.mxu0 0
        %682 = vmatpush1.bf16.msra.mxu0 0
        %683 = vmatprep.subr.bf16.mxu0 0
        %684 = vmatpush1.bf16.msra.mxu0 0
        %685 = vmatprep.subr.bf16.mxu0 0
        %686 = vmatpush1.bf16.msra.mxu0 0
        %687 = vmatprep.subr.bf16.mxu0 0
        %688 = vmatpush1.bf16.msra.mxu0 0
        %689 = vmatprep.subr.bf16.mxu0 0
        %690 = vmatpush1.bf16.msra.mxu0 0
        %691 = vmatprep.subr.bf16.mxu0 0
        %692 = vmatpush1.bf16.msra.mxu0 0
        %693 = vmatprep.subr.bf16.mxu0 0
        %694 = vmatpush1.bf16.msra.mxu0 0
        %695 = vmatprep.subr.bf16.mxu0 0
        %696 = vmatpush1.bf16.msra.mxu0 0
        %697 = vmatprep.subr.bf16.mxu0 0
        %698 = vmatpush1.bf16.msra.mxu0 0
        %699 = vmatprep.subr.bf16.mxu0 0
        %700 = vmatpush1.bf16.msra.mxu0 0
        %701 = vmatprep.subr.bf16.mxu0 0
        %702 = vmatpush1.bf16.msra.mxu0 0
        %703 = vmatprep.subr.bf16.mxu0 0
        %704 = vmatpush1.bf16.msra.mxu0 0
        %705 = vmatprep.subr.bf16.mxu0 0
        %706 = vmatpush1.bf16.msra.mxu0 0
        %707 = vmatprep.subr.bf16.mxu0 0
        %708 = vmatpush1.bf16.msra.mxu0 0
        %709 = vmatprep.mubr.bf16.mxu0 0
        %710 = vmatmul.mubr.bf16.gmra.mrb[0].mxu0 %v675
        %v711 = vpop.f32.mrb[0].mxu0
        %v712 = vadd.f32 0.0, %v711
        %v713 = vpop.f32.mrb[0].mxu0
        %v714 = vpop.f32.mrb[0].mxu0
        %v715 = vpop.f32.mrb[0].mxu0
        %716 = vdwg.mxu0
        %s717 = scalar_lea.vmem [#allocation10], 8
        %v718 = vld [vmem:[%s717] sm:$0xff]
        %v719 = vmul.f32 %v712, %v718
        %v720 = vround.ne.pseudo %v719
        %v721 = vsub.f32 %v719, %v720
        %v722 = vmul.f32 %v721, %v721
        %v723 = vmul.f32 %v722, %v721
        %v724 = vadd.f32 %v720, %v723
        %s725 = scalar_lea.vmem [#allocation11], 8
        %v726 = vld [vmem:[%s725] sm:$0xff]
        %v727 = vmul.f32 %v724, %v726
        %v728 = vpack.c.bf16 %v727, %v727
        %v730 = vsel %vm479, %v728, 0
        %732 = vmatprep.subr.bf16.mxu0 0
        %733 = vmatpush1.bf16.msra.mxu0 %v537
        %734 = vmatprep.subr.bf16.mxu0 0
        %735 = vmatpush1.bf16.msra.mxu0 0
        %736 = vmatprep.subr.bf16.mxu0 0
        %737 = vmatpush1.bf16.msra.mxu0 0
        %738 = vmatprep.subr.bf16.mxu0 0
        %739 = vmatpush1.bf16.msra.mxu0 0
        %740 = vmatprep.subr.bf16.mxu0 0
        %741 = vmatpush1.bf16.msra.mxu0 0
        %742 = vmatprep.subr.bf16.mxu0 0
        %743 = vmatpush1.bf16.msra.mxu0 0
        %744 = vmatprep.subr.bf16.mxu0 0
        %745 = vmatpush1.bf16.msra.mxu0 0
        %746 = vmatprep.subr.bf16.mxu0 0
        %747 = vmatpush1.bf16.msra.mxu0 0
        %748 = vmatprep.subr.bf16.mxu0 0
        %749 = vmatpush1.bf16.msra.mxu0 0
        %750 = vmatprep.subr.bf16.mxu0 0
        %751 = vmatpush1.bf16.msra.mxu0 0
        %752 = vmatprep.subr.bf16.mxu0 0
        %753 = vmatpush1.bf16.msra.mxu0 0
        %754 = vmatprep.subr.bf16.mxu0 0
        %755 = vmatpush1.bf16.msra.mxu0 0
        %756 = vmatprep.subr.bf16.mxu0 0
        %757 = vmatpush1.bf16.msra.mxu0 0
        %758 = vmatprep.subr.bf16.mxu0 0
        %759 = vmatpush1.bf16.msra.mxu0 0
        %760 = vmatprep.subr.bf16.mxu0 0
        %761 = vmatpush1.bf16.msra.mxu0 0
        %762 = vmatprep.subr.bf16.mxu0 0
        %763 = vmatpush1.bf16.msra.mxu0 0
        %764 = vmatprep.mubr.bf16.mxu0 0
        %765 = vmatmul.mubr.bf16.gmra.mrb[0].mxu0 %v730
        %v766 = vpop.f32.mrb[0].mxu0
        %v767 = vadd.f32 0.0, %v766
        %v768 = vpop.f32.mrb[0].mxu0
        %v769 = vpop.f32.mrb[0].mxu0
        %v770 = vpop.f32.mrb[0].mxu0
        %771 = vdwg.mxu0
        %v772 = vpack.c.bf16 %v767, %v767
        %v774 = vsel %vm428, %v772, 0
        %776 = vmatprep.subr.bf16.mxu0 0
        %777 = vmatpush1.bf16.msra.mxu0 %v774
        %778 = vmatprep.subr.bf16.mxu0 0
        %779 = vmatpush1.bf16.msra.mxu0 0
        %780 = vmatprep.subr.bf16.mxu0 0
        %781 = vmatpush1.bf16.msra.mxu0 0
        %782 = vmatprep.subr.bf16.mxu0 0
        %783 = vmatpush1.bf16.msra.mxu0 0
        %784 = vmatprep.subr.bf16.mxu0 0
        %785 = vmatpush1.bf16.msra.mxu0 0
        %786 = vmatprep.subr.bf16.mxu0 0
        %787 = vmatpush1.bf16.msra.mxu0 0
        %788 = vmatprep.subr.bf16.mxu0 0
        %789 = vmatpush1.bf16.msra.mxu0 0
        %790 = vmatprep.subr.bf16.mxu0 0
        %791 = vmatpush1.bf16.msra.mxu0 0
        %792 = vmatprep.subr.bf16.mxu0 0
        %793 = vmatpush1.bf16.msra.mxu0 0
        %794 = vmatprep.subr.bf16.mxu0 0
        %795 = vmatpush1.bf16.msra.mxu0 0
        %796 = vmatprep.subr.bf16.mxu0 0
        %797 = vmatpush1.bf16.msra.mxu0 0
        %798 = vmatprep.subr.bf16.mxu0 0
        %799 = vmatpush1.bf16.msra.mxu0 0
        %800 = vmatprep.subr.bf16.mxu0 0
        %801 = vmatpush1.bf16.msra.mxu0 0
        %802 = vmatprep.subr.bf16.mxu0 0
        %803 = vmatpush1.bf16.msra.mxu0 0
        %804 = vmatprep.subr.bf16.mxu0 0
        %805 = vmatpush1.bf16.msra.mxu0 0
        %806 = vmatprep.subr.bf16.mxu0 0
        %807 = vmatpush1.bf16.msra.mxu0 0
        %808 = vmatprep.mubr.bf16.mxu0 0
        %809 = vmatmul.mubr.bf16.gmra.mrb[0].mxu0 %v584
        %v810 = vpop.f32.mrb[0].mxu0
        %v811 = vadd.f32 0.0, %v810
        %v812 = vpop.f32.mrb[0].mxu0
        %v813 = vpop.f32.mrb[0].mxu0
        %v814 = vpop.f32.mrb[0].mxu0
        %815 = vdwg.mxu0
        %v816 = vpack.c.bf16 %v416, %v416
        %v818 = vsel %vm428, %v816, 0
        %820 = vmatprep.subr.bf16.mxu0 0
        %821 = vmatpush1.bf16.msra.mxu0 %v818
        %822 = vmatprep.subr.bf16.mxu0 0
        %823 = vmatpush1.bf16.msra.mxu0 0
        %824 = vmatprep.subr.bf16.mxu0 0
        %825 = vmatpush1.bf16.msra.mxu0 0
        %826 = vmatprep.subr.bf16.mxu0 0
        %827 = vmatpush1.bf16.msra.mxu0 0
        %828 = vmatprep.subr.bf16.mxu0 0
        %829 = vmatpush1.bf16.msra.mxu0 0
        %830 = vmatprep.subr.bf16.mxu0 0
        %831 = vmatpush1.bf16.msra.mxu0 0
        %832 = vmatprep.subr.bf16.mxu0 0
        %833 = vmatpush1.bf16.msra.mxu0 0
        %834 = vmatprep.subr.bf16.mxu0 0
        %835 = vmatpush1.bf16.msra.mxu0 0
        %836 = vmatprep.subr.bf16.mxu0 0
        %837 = vmatpush1.bf16.msra.mxu0 0
        %838 = vmatprep.subr.bf16.mxu0 0
        %839 = vmatpush1.bf16.msra.mxu0 0
        %840 = vmatprep.subr.bf16.mxu0 0
        %841 = vmatpush1.bf16.msra.mxu0 0
        %842 = vmatprep.subr.bf16.mxu0 0
        %843 = vmatpush1.bf16.msra.mxu0 0
        %844 = vmatprep.subr.bf16.mxu0 0
        %845 = vmatpush1.bf16.msra.mxu0 0
        %846 = vmatprep.subr.bf16.mxu0 0
        %847 = vmatpush1.bf16.msra.mxu0 0
        %848 = vmatprep.subr.bf16.mxu0 0
        %849 = vmatpush1.bf16.msra.mxu0 0
        %850 = vmatprep.subr.bf16.mxu0 0
        %851 = vmatpush1.bf16.msra.mxu0 0
        %852 = vmatprep.mubr.bf16.mxu0 0
        %853 = vmatmul.mubr.bf16.gmra.mrb[0].mxu0 %v426
        %v854 = vpop.f32.mrb[0].mxu0
        %v855 = vadd.f32 0.0, %v854
        %v856 = vpop.f32.mrb[0].mxu0
        %v857 = vpop.f32.mrb[0].mxu0
        %v858 = vpop.f32.mrb[0].mxu0
        %859 = vdwg.mxu0
        %v860 = vpack.c.bf16 %v855, %v855
        %v862 = vsel %vm479, %v860, 0
        %864 = vmatprep.subr.bf16.mxu0 0
        %865 = vmatpush1.bf16.msra.mxu0 %v477
        %866 = vmatprep.subr.bf16.mxu0 0
        %867 = vmatpush1.bf16.msra.mxu0 0
        %868 = vmatprep.subr.bf16.mxu0 0
        %869 = vmatpush1.bf16.msra.mxu0 0
        %870 = vmatprep.subr.bf16.mxu0 0
        %871 = vmatpush1.bf16.msra.mxu0 0
        %872 = vmatprep.subr.bf16.mxu0 0
        %873 = vmatpush1.bf16.msra.mxu0 0
        %874 = vmatprep.subr.bf16.mxu0 0
        %875 = vmatpush1.bf16.msra.mxu0 0
        %876 = vmatprep.subr.bf16.mxu0 0
        %877 = vmatpush1.bf16.msra.mxu0 0
        %878 = vmatprep.subr.bf16.mxu0 0
        %879 = vmatpush1.bf16.msra.mxu0 0
        %880 = vmatprep.subr.bf16.mxu0 0
        %881 = vmatpush1.bf16.msra.mxu0 0
        %882 = vmatprep.subr.bf16.mxu0 0
        %883 = vmatpush1.bf16.msra.mxu0 0
        %884 = vmatprep.subr.bf16.mxu0 0
        %885 = vmatpush1.bf16.msra.mxu0 0
        %886 = vmatprep.subr.bf16.mxu0 0
        %887 = vmatpush1.bf16.msra.mxu0 0
        %888 = vmatprep.subr.bf16.mxu0 0
        %889 = vmatpush1.bf16.msra.mxu0 0
        %890 = vmatprep.subr.bf16.mxu0 0
        %891 = vmatpush1.bf16.msra.mxu0 0
        %892 = vmatprep.subr.bf16.mxu0 0
        %893 = vmatpush1.bf16.msra.mxu0 0
        %894 = vmatprep.subr.bf16.mxu0 0
        %895 = vmatpush1.bf16.msra.mxu0 0
        %896 = vmatprep.mubr.bf16.mxu0 0
        %897 = vmatmul.mubr.bf16.gmra.mrb[0].mxu0 %v862
        %v898 = vpop.f32.mrb[0].mxu0
        %v899 = vadd.f32 0.0, %v898
        %v900 = vpop.f32.mrb[0].mxu0
        %v901 = vpop.f32.mrb[0].mxu0
        %v902 = vpop.f32.mrb[0].mxu0
        %903 = vdwg.mxu0
        %s904 = scalar_lea.vmem [#allocation10], 16
        %v905 = vld [vmem:[%s904] sm:$0xff]
        %v906 = vmul.f32 %v899, %v905
        %v907 = vround.ne.pseudo %v906
        %v908 = vsub.f32 %v906, %v907
        %v909 = vmul.f32 %v908, %v908
        %v910 = vmul.f32 %v909, %v908
        %v911 = vadd.f32 %v907, %v910
        %s912 = scalar_lea.vmem [#allocation11], 16
        %v913 = vld [vmem:[%s912] sm:$0xff]
        %v914 = vmul.f32 %v911, %v913
        %v915 = vpack.c.bf16 %v914, %v914
        %v917 = vsel %vm479, %v915, 0
        %919 = vmatprep.subr.bf16.mxu0 0
        %920 = vmatpush1.bf16.msra.mxu0 %v537
        %921 = vmatprep.subr.bf16.mxu0 0
        %922 = vmatpush1.bf16.msra.mxu0 0
        %923 = vmatprep.subr.bf16.mxu0 0
        %924 = vmatpush1.bf16.msra.mxu0 0
        %925 = vmatprep.subr.bf16.mxu0 0
        %926 = vmatpush1.bf16.msra.mxu0 0
        %927 = vmatprep.subr.bf16.mxu0 0
        %928 = vmatpush1.bf16.msra.mxu0 0
        %929 = vmatprep.subr.bf16.mxu0 0
        %930 = vmatpush1.bf16.msra.mxu0 0
        %931 = vmatprep.subr.bf16.mxu0 0
        %932 = vmatpush1.bf16.msra.mxu0 0
        %933 = vmatprep.subr.bf16.mxu0 0
        %934 = vmatpush1.bf16.msra.mxu0 0
        %935 = vmatprep.subr.bf16.mxu0 0
        %936 = vmatpush1.bf16.msra.mxu0 0
        %937 = vmatprep.subr.bf16.mxu0 0
        %938 = vmatpush1.bf16.msra.mxu0 0
        %939 = vmatprep.subr.bf16.mxu0 0
        %940 = vmatpush1.bf16.msra.mxu0 0
        %941 = vmatprep.subr.bf16.mxu0 0
        %942 = vmatpush1.bf16.msra.mxu0 0
        %943 = vmatprep.subr.bf16.mxu0 0
        %944 = vmatpush1.bf16.msra.mxu0 0
        %945 = vmatprep.subr.bf16.mxu0 0
        %946 = vmatpush1.bf16.msra.mxu0 0
        %947 = vmatprep.subr.bf16.mxu0 0
        %948 = vmatpush1.bf16.msra.mxu0 0
        %949 = vmatprep.subr.bf16.mxu0 0
        %950 = vmatpush1.bf16.msra.mxu0 0
        %951 = vmatprep.mubr.bf16.mxu0 0
        %952 = vmatmul.mubr.bf16.gmra.mrb[0].mxu0 %v917
        %v953 = vpop.f32.mrb[0].mxu0
        %v954 = vadd.f32 0.0, %v953
        %v955 = vpop.f32.mrb[0].mxu0
        %v956 = vpop.f32.mrb[0].mxu0
        %v957 = vpop.f32.mrb[0].mxu0
        %958 = vdwg.mxu0
        %v959 = vpack.c.bf16 %v954, %v954
        %v961 = vsel %vm428, %v959, 0
        %963 = vmatprep.subr.bf16.mxu0 0
        %964 = vmatpush1.bf16.msra.mxu0 %v961
        %965 = vmatprep.subr.bf16.mxu0 0
        %966 = vmatpush1.bf16.msra.mxu0 0
        %967 = vmatprep.subr.bf16.mxu0 0
        %968 = vmatpush1.bf16.msra.mxu0 0
        %969 = vmatprep.subr.bf16.mxu0 0
        %970 = vmatpush1.bf16.msra.mxu0 0
        %971 = vmatprep.subr.bf16.mxu0 0
        %972 = vmatpush1.bf16.msra.mxu0 0
        %973 = vmatprep.subr.bf16.mxu0 0
        %974 = vmatpush1.bf16.msra.mxu0 0
        %975 = vmatprep.subr.bf16.mxu0 0
        %976 = vmatpush1.bf16.msra.mxu0 0
        %977 = vmatprep.subr.bf16.mxu0 0
        %978 = vmatpush1.bf16.msra.mxu0 0
        %979 = vmatprep.subr.bf16.mxu0 0
        %980 = vmatpush1.bf16.msra.mxu0 0
        %981 = vmatprep.subr.bf16.mxu0 0
        %982 = vmatpush1.bf16.msra.mxu0 0
        %983 = vmatprep.subr.bf16.mxu0 0
        %984 = vmatpush1.bf16.msra.mxu0 0
        %985 = vmatprep.subr.bf16.mxu0 0
        %986 = vmatpush1.bf16.msra.mxu0 0
        %987 = vmatprep.subr.bf16.mxu0 0
        %988 = vmatpush1.bf16.msra.mxu0 0
        %989 = vmatprep.subr.bf16.mxu0 0
        %990 = vmatpush1.bf16.msra.mxu0 0
        %991 = vmatprep.subr.bf16.mxu0 0
        %992 = vmatpush1.bf16.msra.mxu0 0
        %993 = vmatprep.subr.bf16.mxu0 0
        %994 = vmatpush1.bf16.msra.mxu0 0
        %995 = vmatprep.mubr.bf16.mxu0 0
        %996 = vmatmul.mubr.bf16.gmra.mrb[0].mxu0 %v584
        %v997 = vpop.f32.mrb[0].mxu0
        %v998 = vadd.f32 0.0, %v997
        %v999 = vpop.f32.mrb[0].mxu0
        %v1000 = vpop.f32.mrb[0].mxu0
        %v1001 = vpop.f32.mrb[0].mxu0
        %1002 = vdwg.mxu0
        %v1003 = vmul.f32 %v624, 0.003921569
        %v1004 = vmul.f32 %v998, 0.005498039
        %v1005 = vadd.f32 %v1003, %v1004
        %v1006 = vadd.f32 %v1005, 0.5019608
        %v1007 = vmul.f32 %v811, 0.0013495529
        %v1008 = vsub.f32 %v1003, %v1007
        %v1009 = vmul.f32 %v998, 0.0028005333
        %v1010 = vsub.f32 %v1008, %v1009
        %v1011 = vadd.f32 %v1010, 0.5019608
        %v1012 = vmul.f32 %v811, 0.0069490196
        %v1013 = vadd.f32 %v1003, %v1012
        %v1014 = vadd.f32 %v1013, 0.5019608
        %v1015 = vmax.f32 %v1006, 0.0
        %v1016 = vmin.f32 %v1015, 1.0
        %1017 = vst.msk [vmem:[%s394] sm:$0xff] %vm479, %v1016
        %v1018 = vmax.f32 %v1011, 0.0
        %v1019 = vmin.f32 %v1018, 1.0
        %s1020 = scalar_lea.vmem %s394, 8 [#allocation13]
        %1021 = vst.msk [vmem:[%s1020] sm:$0xff] %vm479, %v1019
        %v1022 = vmax.f32 %v1014, 0.0
        %v1023 = vmin.f32 %v1022, 1.0
        %s1024 = scalar_lea.vmem %s394, 16 [#allocation13]
        %1025 = vst.msk [vmem:[%s1024] sm:$0xff] %vm479, %v1023
        %s1026 = sand.u32 %s214, 1
        %s1027 = scalar_lea.sflag [#allocation4], %s1026
        %s1028 = sand.u32 %s214, 1
        %s1029 = smul.addr %s1028, 24
        %s1030 = scalar_lea.vmem [#allocation13], %s1029
        // Predicated region
        $region73: #{tpu_custom_call.1} parent=47 // pred_check
          %p1031 = pneg %p224
        $region74: #{tpu_custom_call.1} parent=47 // pred_check_branch
          %1033 = sbr.rel (%p1031) target = $region76
        $region75: #{tpu_custom_call.1} parent=47 // pred_region
          %s1035 = ssub.s32 384, 384
          %1036 = vsyncadd %s1027, %s1035
          %s1037 = sadd.s32 %s34, %s33
          %s1038 = smul.addr %s32, 6
          %s1039 = sadd.s32 %s1037, %s1038
          %s1040 = smul.addr %s1039, 128
          %s1041 = scalar_lea.hbm %s7, %s1040
          %s1042 = sshll.u32 %s1030, 4
          %s1043 = int_to_ptr.vmem [resolvable:$true] %s1042
          %1048 = dma.vmem_to_hbm [thread:$0]  %s1043, 384, %s1041, %s1027, 128, 256, 8
        $region76: #{tpu_custom_call.1} parent=47 // pred_fallthru
          _
      $region48: #{tpu_custom_call.1} parent=5 // pred_fallthru
        _
      %p1049 = scmp.le.s32.totalorder 2, %s22
      // Predicated region
      $region77: #{tpu_custom_call.1} parent=5 // pred_check
        %p1050 = pneg %p1049
      $region78: #{tpu_custom_call.1} parent=5 // pred_check_branch
        %1052 = sbr.rel (%p1050) target = $region80
      $region79: #{tpu_custom_call.1} parent=5 // pred_region
        %s1053 = ssub.s32 %s22, 2
        // Predicated region
        $region81: #{tpu_custom_call.1} parent=79 // pred_check
          %p1054 = pneg %p230
        $region82: #{tpu_custom_call.1} parent=79 // pred_check_branch
          %1056 = sbr.rel (%p1054) target = $region84
        $region83: #{tpu_custom_call.1} parent=79 // pred_region
          %s1057 = sand.u32 %s215, 1
          %s1058 = scalar_lea.sflag [#allocation4], %s1057
          %s1059 = sand.u32 %s215, 1
          %s1060 = smul.addr %s1059, 24
          %s1061 = scalar_lea.vmem [#allocation13], %s1060
          %1062 = dma.done %s1058, 384
        $region84: #{tpu_custom_call.1} parent=79 // pred_fallthru
          _
      $region80: #{tpu_custom_call.1} parent=5 // pred_fallthru
        _
    $region6: #{tpu_custom_call.1} parent=1 // loop_footer
      %s26 = sadd.s32 1, %s22
    $region7: #{tpu_custom_call.1} parent=1 // loop_footer_branch
      %21 = sbr.rel target = $region3
    $region8: #{tpu_custom_call.1} parent=1 // loop_exit
      _
    %1063 = vsyncpa [#allocation3], 1
    %s1064 = scalar_lea.sflag [#allocation3], 1
    %1065 = vsyncpa %s1064, 1
    %1066 = vsyncpa [#allocation6], 1
    %1067 = vsyncpa [#allocation9], 1
    %1068 = vsyncpa [#allocation12], 1
    %1069 = vsyncpa [#allocation4], 1
    %s1070 = scalar_lea.sflag [#allocation4], 1
    %1071 = vsyncpa %s1070, 1

</llo_original>
